<compile_context>
chip_gen: v7x
topology: tpu7x:2x2x1
jax: 0.10.0
libtpu: 0.0.40
codegen_flags: <defaults>
</compile_context>

<pallas_src>
from functools import partial

import numpy as np
import jax
import jax.numpy as jnp
from jax.experimental import pallas as pl
from jax.experimental.pallas import tpu as pltpu


def _deconv_phase_kernel(x_ref, w_ref, b_ref, o_ref, p_scr,
                         *, s, J, I, Cin, Wpad, L, OFFH, OFFW):
    """One batch image per grid step.

    x_ref : (1, Cin, Lflat)        zero-padded input, spatially flattened (row-major)
    w_ref : (s*s, Cout, J*I*Cin)   per-phase fused tap weights (eq-LR scale folded in)
    b_ref : (Cout, 1)              bias
    o_ref : (1, s*s, Cout, L)      phase-decomposed output, L = A * Wpad (lane-dense)
    p_scr : (J*I*Cin, L)           VMEM scratch: im2col patch matrix for one phase
    """
    bias = b_ref[...]                                        # (Cout, 1)
    for rho in range(s):                                     # output row phase (static)
        for sig in range(s):                                 # output col phase (static)
            ph = rho * s + sig
            base = OFFH[rho] * Wpad + OFFW[sig]              # static flat offset
            # Assemble the patch matrix: each tap is a flat-shifted window of the
            # padded input; shifts are static so these are plain static slices.
            for t_j in range(J):
                for t_i in range(I):
                    t = t_j * I + t_i
                    start = base + t_j * Wpad + t_i
                    p_scr[pl.ds(t * Cin, Cin), :] = x_ref[0, :, pl.ds(start, L)]
            # One fused MXU matmul per phase: (Cout, J*I*Cin) x (J*I*Cin, L).
            acc = jnp.dot(w_ref[ph], p_scr[...],
                          preferred_element_type=jnp.float32)
            o_ref[0, ph] = (acc + bias).astype(o_ref.dtype)  # (Cout, L) lane-dense store


def equalized_deconv2d_forward(x_nchw, weight_pt, bias, scale, stride, pad):
    """x_nchw: (N, Cin, H, W); weight_pt: (Cin, Cout, K, K) (PyTorch ConvTranspose2d)."""
    N, Cin, H, W = x_nchw.shape
    _, Cout, K, K2 = weight_pt.shape
    assert K == K2
    s, p = int(stride), int(pad)
    OH = (H - 1) * s - 2 * p + K
    OW = (W - 1) * s - 2 * p + K
    assert OH > 0 and OW > 0
    # TODO(synk): support (K - 2*pad) % stride != 0 (phases with unequal row counts).
    assert (K - 2 * p) % s == 0, "kernel assumes OH, OW divisible by stride"
    A, B = OH // s, OW // s                     # per-phase output grid
    J = -(-K // s)                              # ceil(K/s) taps per dim (phantom taps -> 0 weight)
    I = J

    # ---- halo padding of the compact input (no zero-upsampling) ----
    fl = [(r + p) // s for r in range(s)]       # floor((phase + pad) / stride)
    Pt = max(0, (J - 1) - min(fl))
    Pb = max(0, (A - 1) + max(fl) - (H - 1))
    Pl = max(0, (I - 1) - min(fl))
    Pr = max(0, (B - 1) + max(fl) - (W - 1))
    Hpad, Wpad = H + Pt + Pb, W + Pl + Pr
    OFFH = tuple(fl[r] - (J - 1) + Pt for r in range(s))
    OFFW = tuple(fl[c] - (I - 1) + Pl for c in range(s))
    L = A * Wpad                                # flat per-phase output length (junk cols cropped later)
    Lflat = (Hpad + 1) * Wpad                   # +1 zero row so flat windows never read OOB

    x = x_nchw.astype(jnp.float32)
    xpad = jnp.pad(x, ((0, 0), (0, 0), (Pt, Pb + 1), (Pl, Pr)))
    xflat = xpad.reshape(N, Cin, Lflat)

    # ---- fold equalized-LR scale into the per-phase fused tap weights ----
    w_s = weight_pt.astype(jnp.float32) * jnp.asarray(scale, jnp.float32)
    Cp = J * I * Cin
    phase_mats = []
    for rho in range(s):
        for sig in range(s):
            taps = []
            for t_j in range(J):
                kh = (rho + p) % s + s * (J - 1 - t_j)
                for t_i in range(I):
                    kw = (sig + p) % s + s * (I - 1 - t_i)
                    if kh < K and kw < K:
                        taps.append(w_s[:, :, kh, kw])                 # (Cin, Cout)
                    else:
                        taps.append(jnp.zeros((Cin, Cout), jnp.float32))
            wmat = jnp.stack(taps, 0).reshape(Cp, Cout).T              # (Cout, Cp)
            phase_mats.append(wmat)
    w_ph = jnp.stack(phase_mats, 0)                                    # (s*s, Cout, Cp)

    bias2d = bias.reshape(Cout, 1).astype(jnp.float32)

    kernel = partial(_deconv_phase_kernel, s=s, J=J, I=I, Cin=Cin,
                     Wpad=Wpad, L=L, OFFH=OFFH, OFFW=OFFW)
    out_ph = pl.pallas_call(
        kernel,
        out_shape=jax.ShapeDtypeStruct((N, s * s, Cout, L), jnp.float32),
        grid=(N,),
        in_specs=[
            pl.BlockSpec((1, Cin, Lflat), lambda n: (n, 0, 0)),        # compact padded input
            pl.BlockSpec((s * s, Cout, Cp), lambda n: (0, 0, 0)),      # fused phase weights
            pl.BlockSpec((Cout, 1), lambda n: (0, 0)),                 # bias
        ],
        out_specs=pl.BlockSpec((1, s * s, Cout, L), lambda n: (n, 0, 0, 0)),
        scratch_shapes=[pltpu.VMEM((Cp, L), jnp.float32)],
        compiler_params=pltpu.CompilerParams(dimension_semantics=("parallel",)),
    )(xflat, w_ph, bias2d)

    # Phase interleave (rho/sig minor) + crop junk/pad columns -> NCHW.
    y = out_ph.reshape(N, s, s, Cout, A, Wpad)[..., :B]
    y = jnp.transpose(y, (0, 3, 4, 1, 5, 2)).reshape(N, Cout, OH, OW)
    return y


def _numpy_reference(x_nchw, weight_pt, bias, scale, stride, pad):
    x = np.asarray(x_nchw, np.float32) * float(scale)
    W = np.asarray(weight_pt, np.float32)
    N, Cin, H, Wd = x.shape
    _, Cout, K, _ = W.shape
    OH = (H - 1) * stride - 2 * pad + K
    OW = (Wd - 1) * stride - 2 * pad + K
    out = np.zeros((N, Cout, OH, OW), np.float32)
    for ih in range(H):
        for iw in range(Wd):
            for kh in range(K):
                for kw in range(K):
                    oh = ih * stride - pad + kh
                    ow = iw * stride - pad + kw
                    if 0 <= oh < OH and 0 <= ow < OW:
                        out[:, :, oh, ow] += x[:, :, ih, iw] @ W[:, :, kh, kw]
    return out + np.asarray(bias, np.float32).reshape(1, Cout, 1, 1)


if __name__ == "__main__":
    # module hyperparameters
    c_in, c_out, k_size, stride, pad = 4, 8, 4, 2, 1

    key = jax.random.PRNGKey(0)
    kx, kw, kb = jax.random.split(key, 3)

    # deterministic "kaiming" init for ConvTranspose2d weight (Cin, Cout, K, K)
    fan_in = c_out * k_size * k_size
    std = np.sqrt(2.0 / (1.0 + 1.0 ** 2)) / np.sqrt(fan_in)
    w0 = jax.random.normal(kw, (c_in, c_out, k_size, k_size), jnp.float32) * std
    scale = jnp.sqrt(jnp.mean(w0 ** 2))          # self.scale
    weight = w0 / scale                          # stored (equalized) weight
    bias = 0.1 * jax.random.normal(kb, (c_out,), jnp.float32)  # nonzero to exercise bias add

    # input (NCHW, like PyTorch)
    x = jax.random.normal(kx, (2, c_in, 16, 16), jnp.float32)

    y = equalized_deconv2d_forward(x, weight, bias, scale, stride, pad)
    y = jax.block_until_ready(y)

    ref = _numpy_reference(np.asarray(x), np.asarray(weight), np.asarray(bias),
                           float(scale), stride, pad)
    np.testing.assert_allclose(np.asarray(y), ref, rtol=1e-4, atol=1e-4)
    print("KERNEL_OK")
</pallas_src>

<mosaic_0001>
module attributes {stable_mosaic.version = 11 : i64} {
  func.func @_deconv_phase_kernel(%arg0: i32, %arg1: memref<1x4x342xf32, #tpu.memory_space<vmem>>, %arg2: memref<4x8x16xf32, #tpu.memory_space<vmem>>, %arg3: memref<8x1xf32, #tpu.memory_space<vmem>>, %arg4: memref<1x4x8x288xf32, #tpu.memory_space<vmem>>, %arg5: memref<16x288xf32, #tpu.memory_space<vmem>>) attributes {dimension_semantics = [#tpu.dimension_semantics<parallel>], iteration_bounds = array<i64: 2>, scalar_prefetch = 0 : i64, scratch_operands = 1 : i64, tpu.core_type = #tpu.core_type<tc>, window_params = [{transform_indices = @transform_0, window_bounds = array<i64: 1, 4, 342>}, {pipeline_mode = #tpu.pipeline_mode<synchronous>, transform_indices = @transform_1, window_bounds = array<i64: 4, 8, 16>}, {pipeline_mode = #tpu.pipeline_mode<synchronous>, transform_indices = @transform_2, window_bounds = array<i64: 8, 1>}, {transform_indices = @transform_3, window_bounds = array<i64: 1, 4, 8, 288>}]} {
    %c0 = arith.constant 0 : index
    %c0_0 = arith.constant 0 : index
    %0 = vector.load %arg3[%c0, %c0_0] : memref<8x1xf32, #tpu.memory_space<vmem>>, vector<8x1xf32>
    %c0_1 = arith.constant 0 : index
    %c0_2 = arith.constant 0 : index
    %c0_3 = arith.constant 0 : index
    %1 = vector.load %arg1[%c0_1, %c0_2, %c0_3] : memref<1x4x342xf32, #tpu.memory_space<vmem>>, vector<1x4x288xf32>
    %2 = vector.shape_cast %1 : vector<1x4x288xf32> to vector<4x288xf32>
    %c0_4 = arith.constant 0 : index
    %c0_5 = arith.constant 0 : index
    %3 = vector.load %arg5[%c0_4, %c0_5] : memref<16x288xf32, #tpu.memory_space<vmem>>, vector<4x288xf32>
    tpu.vector_store %arg5[%c0_4, %c0_5], %2 {strides = array<i32>} : memref<16x288xf32, #tpu.memory_space<vmem>>, vector<4x288xf32>,
    %c0_6 = arith.constant 0 : index
    %c0_7 = arith.constant 0 : index
    %c1 = arith.constant 1 : index
    %4 = vector.load %arg1[%c0_6, %c0_7, %c1] : memref<1x4x342xf32, #tpu.memory_space<vmem>>, vector<1x4x288xf32>
    %5 = vector.shape_cast %4 : vector<1x4x288xf32> to vector<4x288xf32>
    %c4 = arith.constant 4 : index
    %c0_8 = arith.constant 0 : index
    %6 = vector.load %arg5[%c4, %c0_8] : memref<16x288xf32, #tpu.memory_space<vmem>>, vector<4x288xf32>
    tpu.vector_store %arg5[%c4, %c0_8], %5 {strides = array<i32>} : memref<16x288xf32, #tpu.memory_space<vmem>>, vector<4x288xf32>,
    %c0_9 = arith.constant 0 : index
    %c0_10 = arith.constant 0 : index
    %c18 = arith.constant 18 : index
    %7 = vector.load %arg1[%c0_9, %c0_10, %c18] : memref<1x4x342xf32, #tpu.memory_space<vmem>>, vector<1x4x288xf32>
    %8 = vector.shape_cast %7 : vector<1x4x288xf32> to vector<4x288xf32>
    %c8 = arith.constant 8 : index
    %c0_11 = arith.constant 0 : index
    %9 = vector.load %arg5[%c8, %c0_11] : memref<16x288xf32, #tpu.memory_space<vmem>>, vector<4x288xf32>
    tpu.vector_store %arg5[%c8, %c0_11], %8 {strides = array<i32>} : memref<16x288xf32, #tpu.memory_space<vmem>>, vector<4x288xf32>,
    %c0_12 = arith.constant 0 : index
    %c0_13 = arith.constant 0 : index
    %c19 = arith.constant 19 : index
    %10 = vector.load %arg1[%c0_12, %c0_13, %c19] : memref<1x4x342xf32, #tpu.memory_space<vmem>>, vector<1x4x288xf32>
    %11 = vector.shape_cast %10 : vector<1x4x288xf32> to vector<4x288xf32>
    %c12 = arith.constant 12 : index
    %c0_14 = arith.constant 0 : index
    %12 = vector.load %arg5[%c12, %c0_14] : memref<16x288xf32, #tpu.memory_space<vmem>>, vector<4x288xf32>
    tpu.vector_store %arg5[%c12, %c0_14], %11 {strides = array<i32>} : memref<16x288xf32, #tpu.memory_space<vmem>>, vector<4x288xf32>,
    %c0_15 = arith.constant 0 : index
    %c0_16 = arith.constant 0 : index
    %c0_17 = arith.constant 0 : index
    %13 = vector.load %arg2[%c0_15, %c0_16, %c0_17] : memref<4x8x16xf32, #tpu.memory_space<vmem>>, vector<1x8x16xf32>
    %14 = vector.shape_cast %13 : vector<1x8x16xf32> to vector<8x16xf32>
    %c0_18 = arith.constant 0 : index
    %c0_19 = arith.constant 0 : index
    %15 = vector.load %arg5[%c0_18, %c0_19] : memref<16x288xf32, #tpu.memory_space<vmem>>, vector<16x288xf32>
    %cst = arith.constant dense<0.000000e+00> : vector<8x288xf32>
    %16 = tpu.matmul %14, %15, %cst {dimension_numbers = #tpu.dot_dimension_numbers<[1], [0], [0], [1], [0, 0, 1, 1], [], []>} : vector<8x16xf32>, vector<16x288xf32>, vector<8x288xf32> -> vector<8x288xf32>
    %17 = vector.broadcast %0 : vector<8x1xf32> to vector<8x288xf32>
    %18 = arith.addf %16, %17 : vector<8x288xf32>
    %c0_20 = arith.constant 0 : index
    %c0_21 = arith.constant 0 : index
    %c0_22 = arith.constant 0 : index
    %c0_23 = arith.constant 0 : index
    %19 = vector.load %arg4[%c0_20, %c0_21, %c0_22, %c0_23] : memref<1x4x8x288xf32, #tpu.memory_space<vmem>>, vector<1x1x8x288xf32>
    %20 = vector.shape_cast %19 : vector<1x1x8x288xf32> to vector<8x288xf32>
    %21 = vector.shape_cast %18 : vector<8x288xf32> to vector<1x1x8x288xf32>
    tpu.vector_store %arg4[%c0_20, %c0_21, %c0_22, %c0_23], %21 {strides = array<i32>} : memref<1x4x8x288xf32, #tpu.memory_space<vmem>>, vector<1x1x8x288xf32>,
    %c0_24 = arith.constant 0 : index
    %c0_25 = arith.constant 0 : index
    %c1_26 = arith.constant 1 : index
    %22 = vector.load %arg1[%c0_24, %c0_25, %c1_26] : memref<1x4x342xf32, #tpu.memory_space<vmem>>, vector<1x4x288xf32>
    %23 = vector.shape_cast %22 : vector<1x4x288xf32> to vector<4x288xf32>
    %c0_27 = arith.constant 0 : index
    %c0_28 = arith.constant 0 : index
    %24 = vector.load %arg5[%c0_27, %c0_28] : memref<16x288xf32, #tpu.memory_space<vmem>>, vector<4x288xf32>
    tpu.vector_store %arg5[%c0_27, %c0_28], %23 {strides = array<i32>} : memref<16x288xf32, #tpu.memory_space<vmem>>, vector<4x288xf32>,
    %c0_29 = arith.constant 0 : index
    %c0_30 = arith.constant 0 : index
    %c2 = arith.constant 2 : index
    %25 = vector.load %arg1[%c0_29, %c0_30, %c2] : memref<1x4x342xf32, #tpu.memory_space<vmem>>, vector<1x4x288xf32>
    %26 = vector.shape_cast %25 : vector<1x4x288xf32> to vector<4x288xf32>
    %c4_31 = arith.constant 4 : index
    %c0_32 = arith.constant 0 : index
    %27 = vector.load %arg5[%c4_31, %c0_32] : memref<16x288xf32, #tpu.memory_space<vmem>>, vector<4x288xf32>
    tpu.vector_store %arg5[%c4_31, %c0_32], %26 {strides = array<i32>} : memref<16x288xf32, #tpu.memory_space<vmem>>, vector<4x288xf32>,
    %c0_33 = arith.constant 0 : index
    %c0_34 = arith.constant 0 : index
    %c19_35 = arith.constant 19 : index
    %28 = vector.load %arg1[%c0_33, %c0_34, %c19_35] : memref<1x4x342xf32, #tpu.memory_space<vmem>>, vector<1x4x288xf32>
    %29 = vector.shape_cast %28 : vector<1x4x288xf32> to vector<4x288xf32>
    %c8_36 = arith.constant 8 : index
    %c0_37 = arith.constant 0 : index
    %30 = vector.load %arg5[%c8_36, %c0_37] : memref<16x288xf32, #tpu.memory_space<vmem>>, vector<4x288xf32>
    tpu.vector_store %arg5[%c8_36, %c0_37], %29 {strides = array<i32>} : memref<16x288xf32, #tpu.memory_space<vmem>>, vector<4x288xf32>,
    %c0_38 = arith.constant 0 : index
    %c0_39 = arith.constant 0 : index
    %c20 = arith.constant 20 : index
    %31 = vector.load %arg1[%c0_38, %c0_39, %c20] : memref<1x4x342xf32, #tpu.memory_space<vmem>>, vector<1x4x288xf32>
    %32 = vector.shape_cast %31 : vector<1x4x288xf32> to vector<4x288xf32>
    %c12_40 = arith.constant 12 : index
    %c0_41 = arith.constant 0 : index
    %33 = vector.load %arg5[%c12_40, %c0_41] : memref<16x288xf32, #tpu.memory_space<vmem>>, vector<4x288xf32>
    tpu.vector_store %arg5[%c12_40, %c0_41], %32 {strides = array<i32>} : memref<16x288xf32, #tpu.memory_space<vmem>>, vector<4x288xf32>,
    %c1_42 = arith.constant 1 : index
    %c0_43 = arith.constant 0 : index
    %c0_44 = arith.constant 0 : index
    %34 = vector.load %arg2[%c1_42, %c0_43, %c0_44] : memref<4x8x16xf32, #tpu.memory_space<vmem>>, vector<1x8x16xf32>
    %35 = vector.shape_cast %34 : vector<1x8x16xf32> to vector<8x16xf32>
    %c0_45 = arith.constant 0 : index
    %c0_46 = arith.constant 0 : index
    %36 = vector.load %arg5[%c0_45, %c0_46] : memref<16x288xf32, #tpu.memory_space<vmem>>, vector<16x288xf32>
    %cst_47 = arith.constant dense<0.000000e+00> : vector<8x288xf32>
    %37 = tpu.matmul %35, %36, %cst_47 {dimension_numbers = #tpu.dot_dimension_numbers<[1], [0], [0], [1], [0, 0, 1, 1], [], []>} : vector<8x16xf32>, vector<16x288xf32>, vector<8x288xf32> -> vector<8x288xf32>
    %38 = vector.broadcast %0 : vector<8x1xf32> to vector<8x288xf32>
    %39 = arith.addf %37, %38 : vector<8x288xf32>
    %c0_48 = arith.constant 0 : index
    %c1_49 = arith.constant 1 : index
    %c0_50 = arith.constant 0 : index
    %c0_51 = arith.constant 0 : index
    %40 = vector.load %arg4[%c0_48, %c1_49, %c0_50, %c0_51] : memref<1x4x8x288xf32, #tpu.memory_space<vmem>>, vector<1x1x8x288xf32>
    %41 = vector.shape_cast %40 : vector<1x1x8x288xf32> to vector<8x288xf32>
    %42 = vector.shape_cast %39 : vector<8x288xf32> to vector<1x1x8x288xf32>
    tpu.vector_store %arg4[%c0_48, %c1_49, %c0_50, %c0_51], %42 {strides = array<i32>} : memref<1x4x8x288xf32, #tpu.memory_space<vmem>>, vector<1x1x8x288xf32>,
    %c0_52 = arith.constant 0 : index
    %c0_53 = arith.constant 0 : index
    %c18_54 = arith.constant 18 : index
    %43 = vector.load %arg1[%c0_52, %c0_53, %c18_54] : memref<1x4x342xf32, #tpu.memory_space<vmem>>, vector<1x4x288xf32>
    %44 = vector.shape_cast %43 : vector<1x4x288xf32> to vector<4x288xf32>
    %c0_55 = arith.constant 0 : index
    %c0_56 = arith.constant 0 : index
    %45 = vector.load %arg5[%c0_55, %c0_56] : memref<16x288xf32, #tpu.memory_space<vmem>>, vector<4x288xf32>
    tpu.vector_store %arg5[%c0_55, %c0_56], %44 {strides = array<i32>} : memref<16x288xf32, #tpu.memory_space<vmem>>, vector<4x288xf32>,
    %c0_57 = arith.constant 0 : index
    %c0_58 = arith.constant 0 : index
    %c19_59 = arith.constant 19 : index
    %46 = vector.load %arg1[%c0_57, %c0_58, %c19_59] : memref<1x4x342xf32, #tpu.memory_space<vmem>>, vector<1x4x288xf32>
    %47 = vector.shape_cast %46 : vector<1x4x288xf32> to vector<4x288xf32>
    %c4_60 = arith.constant 4 : index
    %c0_61 = arith.constant 0 : index
    %48 = vector.load %arg5[%c4_60, %c0_61] : memref<16x288xf32, #tpu.memory_space<vmem>>, vector<4x288xf32>
    tpu.vector_store %arg5[%c4_60, %c0_61], %47 {strides = array<i32>} : memref<16x288xf32, #tpu.memory_space<vmem>>, vector<4x288xf32>,
    %c0_62 = arith.constant 0 : index
    %c0_63 = arith.constant 0 : index
    %c36 = arith.constant 36 : index
    %49 = vector.load %arg1[%c0_62, %c0_63, %c36] : memref<1x4x342xf32, #tpu.memory_space<vmem>>, vector<1x4x288xf32>
    %50 = vector.shape_cast %49 : vector<1x4x288xf32> to vector<4x288xf32>
    %c8_64 = arith.constant 8 : index
    %c0_65 = arith.constant 0 : index
    %51 = vector.load %arg5[%c8_64, %c0_65] : memref<16x288xf32, #tpu.memory_space<vmem>>, vector<4x288xf32>
    tpu.vector_store %arg5[%c8_64, %c0_65], %50 {strides = array<i32>} : memref<16x288xf32, #tpu.memory_space<vmem>>, vector<4x288xf32>,
    %c0_66 = arith.constant 0 : index
    %c0_67 = arith.constant 0 : index
    %c37 = arith.constant 37 : index
    %52 = vector.load %arg1[%c0_66, %c0_67, %c37] : memref<1x4x342xf32, #tpu.memory_space<vmem>>, vector<1x4x288xf32>
    %53 = vector.shape_cast %52 : vector<1x4x288xf32> to vector<4x288xf32>
    %c12_68 = arith.constant 12 : index
    %c0_69 = arith.constant 0 : index
    %54 = vector.load %arg5[%c12_68, %c0_69] : memref<16x288xf32, #tpu.memory_space<vmem>>, vector<4x288xf32>
    tpu.vector_store %arg5[%c12_68, %c0_69], %53 {strides = array<i32>} : memref<16x288xf32, #tpu.memory_space<vmem>>, vector<4x288xf32>,
    %c2_70 = arith.constant 2 : index
    %c0_71 = arith.constant 0 : index
    %c0_72 = arith.constant 0 : index
    %55 = vector.load %arg2[%c2_70, %c0_71, %c0_72] : memref<4x8x16xf32, #tpu.memory_space<vmem>>, vector<1x8x16xf32>
    %56 = vector.shape_cast %55 : vector<1x8x16xf32> to vector<8x16xf32>
    %c0_73 = arith.constant 0 : index
    %c0_74 = arith.constant 0 : index
    %57 = vector.load %arg5[%c0_73, %c0_74] : memref<16x288xf32, #tpu.memory_space<vmem>>, vector<16x288xf32>
    %cst_75 = arith.constant dense<0.000000e+00> : vector<8x288xf32>
    %58 = tpu.matmul %56, %57, %cst_75 {dimension_numbers = #tpu.dot_dimension_numbers<[1], [0], [0], [1], [0, 0, 1, 1], [], []>} : vector<8x16xf32>, vector<16x288xf32>, vector<8x288xf32> -> vector<8x288xf32>
    %59 = vector.broadcast %0 : vector<8x1xf32> to vector<8x288xf32>
    %60 = arith.addf %58, %59 : vector<8x288xf32>
    %c0_76 = arith.constant 0 : index
    %c2_77 = arith.constant 2 : index
    %c0_78 = arith.constant 0 : index
    %c0_79 = arith.constant 0 : index
    %61 = vector.load %arg4[%c0_76, %c2_77, %c0_78, %c0_79] : memref<1x4x8x288xf32, #tpu.memory_space<vmem>>, vector<1x1x8x288xf32>
    %62 = vector.shape_cast %61 : vector<1x1x8x288xf32> to vector<8x288xf32>
    %63 = vector.shape_cast %60 : vector<8x288xf32> to vector<1x1x8x288xf32>
    tpu.vector_store %arg4[%c0_76, %c2_77, %c0_78, %c0_79], %63 {strides = array<i32>} : memref<1x4x8x288xf32, #tpu.memory_space<vmem>>, vector<1x1x8x288xf32>,
    %c0_80 = arith.constant 0 : index
    %c0_81 = arith.constant 0 : index
    %c19_82 = arith.constant 19 : index
    %64 = vector.load %arg1[%c0_80, %c0_81, %c19_82] : memref<1x4x342xf32, #tpu.memory_space<vmem>>, vector<1x4x288xf32>
    %65 = vector.shape_cast %64 : vector<1x4x288xf32> to vector<4x288xf32>
    %c0_83 = arith.constant 0 : index
    %c0_84 = arith.constant 0 : index
    %66 = vector.load %arg5[%c0_83, %c0_84] : memref<16x288xf32, #tpu.memory_space<vmem>>, vector<4x288xf32>
    tpu.vector_store %arg5[%c0_83, %c0_84], %65 {strides = array<i32>} : memref<16x288xf32, #tpu.memory_space<vmem>>, vector<4x288xf32>,
    %c0_85 = arith.constant 0 : index
    %c0_86 = arith.constant 0 : index
    %c20_87 = arith.constant 20 : index
    %67 = vector.load %arg1[%c0_85, %c0_86, %c20_87] : memref<1x4x342xf32, #tpu.memory_space<vmem>>, vector<1x4x288xf32>
    %68 = vector.shape_cast %67 : vector<1x4x288xf32> to vector<4x288xf32>
    %c4_88 = arith.constant 4 : index
    %c0_89 = arith.constant 0 : index
    %69 = vector.load %arg5[%c4_88, %c0_89] : memref<16x288xf32, #tpu.memory_space<vmem>>, vector<4x288xf32>
    tpu.vector_store %arg5[%c4_88, %c0_89], %68 {strides = array<i32>} : memref<16x288xf32, #tpu.memory_space<vmem>>, vector<4x288xf32>,
    %c0_90 = arith.constant 0 : index
    %c0_91 = arith.constant 0 : index
    %c37_92 = arith.constant 37 : index
    %70 = vector.load %arg1[%c0_90, %c0_91, %c37_92] : memref<1x4x342xf32, #tpu.memory_space<vmem>>, vector<1x4x288xf32>
    %71 = vector.shape_cast %70 : vector<1x4x288xf32> to vector<4x288xf32>
    %c8_93 = arith.constant 8 : index
    %c0_94 = arith.constant 0 : index
    %72 = vector.load %arg5[%c8_93, %c0_94] : memref<16x288xf32, #tpu.memory_space<vmem>>, vector<4x288xf32>
    tpu.vector_store %arg5[%c8_93, %c0_94], %71 {strides = array<i32>} : memref<16x288xf32, #tpu.memory_space<vmem>>, vector<4x288xf32>,
    %c0_95 = arith.constant 0 : index
    %c0_96 = arith.constant 0 : index
    %c38 = arith.constant 38 : index
    %73 = vector.load %arg1[%c0_95, %c0_96, %c38] : memref<1x4x342xf32, #tpu.memory_space<vmem>>, vector<1x4x288xf32>
    %74 = vector.shape_cast %73 : vector<1x4x288xf32> to vector<4x288xf32>
    %c12_97 = arith.constant 12 : index
    %c0_98 = arith.constant 0 : index
    %75 = vector.load %arg5[%c12_97, %c0_98] : memref<16x288xf32, #tpu.memory_space<vmem>>, vector<4x288xf32>
    tpu.vector_store %arg5[%c12_97, %c0_98], %74 {strides = array<i32>} : memref<16x288xf32, #tpu.memory_space<vmem>>, vector<4x288xf32>,
    %c3 = arith.constant 3 : index
    %c0_99 = arith.constant 0 : index
    %c0_100 = arith.constant 0 : index
    %76 = vector.load %arg2[%c3, %c0_99, %c0_100] : memref<4x8x16xf32, #tpu.memory_space<vmem>>, vector<1x8x16xf32>
    %77 = vector.shape_cast %76 : vector<1x8x16xf32> to vector<8x16xf32>
    %c0_101 = arith.constant 0 : index
    %c0_102 = arith.constant 0 : index
    %78 = vector.load %arg5[%c0_101, %c0_102] : memref<16x288xf32, #tpu.memory_space<vmem>>, vector<16x288xf32>
    %cst_103 = arith.constant dense<0.000000e+00> : vector<8x288xf32>
    %79 = tpu.matmul %77, %78, %cst_103 {dimension_numbers = #tpu.dot_dimension_numbers<[1], [0], [0], [1], [0, 0, 1, 1], [], []>} : vector<8x16xf32>, vector<16x288xf32>, vector<8x288xf32> -> vector<8x288xf32>
    %80 = vector.broadcast %0 : vector<8x1xf32> to vector<8x288xf32>
    %81 = arith.addf %79, %80 : vector<8x288xf32>
    %c0_104 = arith.constant 0 : index
    %c3_105 = arith.constant 3 : index
    %c0_106 = arith.constant 0 : index
    %c0_107 = arith.constant 0 : index
    %82 = vector.load %arg4[%c0_104, %c3_105, %c0_106, %c0_107] : memref<1x4x8x288xf32, #tpu.memory_space<vmem>>, vector<1x1x8x288xf32>
    %83 = vector.shape_cast %82 : vector<1x1x8x288xf32> to vector<8x288xf32>
    %84 = vector.shape_cast %81 : vector<8x288xf32> to vector<1x1x8x288xf32>
    tpu.vector_store %arg4[%c0_104, %c3_105, %c0_106, %c0_107], %84 {strides = array<i32>} : memref<1x4x8x288xf32, #tpu.memory_space<vmem>>, vector<1x1x8x288xf32>,
    return
  }
  func.func @transform_0(%arg0: i32) -> (i32, i32, i32) {
    %c0_i32 = arith.constant 0 : i32
    %c0_i32_0 = arith.constant 0 : i32
    %c0_i32_1 = arith.constant 0 : i32
    return %arg0, %c0_i32, %c0_i32_0 : i32, i32, i32
  }
  func.func @transform_1(%arg0: i32) -> (i32, i32, i32) {
    %c0_i32 = arith.constant 0 : i32
    %c0_i32_0 = arith.constant 0 : i32
    %c0_i32_1 = arith.constant 0 : i32
    %c0_i32_2 = arith.constant 0 : i32
    return %c0_i32, %c0_i32_0, %c0_i32_1 : i32, i32, i32
  }
  func.func @transform_2(%arg0: i32) -> (i32, i32) {
    %c0_i32 = arith.constant 0 : i32
    %c0_i32_0 = arith.constant 0 : i32
    %c0_i32_1 = arith.constant 0 : i32
    return %c0_i32, %c0_i32_0 : i32, i32
  }
  func.func @transform_3(%arg0: i32) -> (i32, i32, i32, i32) {
    %c0_i32 = arith.constant 0 : i32
    %c0_i32_0 = arith.constant 0 : i32
    %c0_i32_1 = arith.constant 0 : i32
    %c0_i32_2 = arith.constant 0 : i32
    return %arg0, %c0_i32, %c0_i32_0, %c0_i32_1 : i32, i32, i32, i32
  }
}

</mosaic_0001>

<llo_original>
// kernel: tpu_custom_call.1
$region0: #{tpu_custom_call.1}
  #allocation0 [shape = 'u32[]', space=smem, size = 0x4, offset = 0x4, fixed_abs, tag = 'smem constant byte address 0x4 - core index']
  #allocation1 [shape = 'u32[144,128]{1,0:T(1,128)}', space=vmem, size = 0x12000, scoped, tag = 'internal scratch']
  #allocation2 [shape = 'f32[16,288]{1,0:T(8,128)}', space=vmem, size = 0x6000, scoped, tag = 'scratch operand']
  %s0 = inlined_call_operand.hbm [shape: f32[2,4,342], index: 0, kind: input, shape index: {}]
  %s1 = inlined_call_operand.hbm [shape: f32[4,8,16], index: 1, kind: input, shape index: {}]
  %s2 = inlined_call_operand.vmem [shape: f32[8,1], index: 2, kind: input, shape index: {}]
  %s3 = inlined_call_operand.hbm [shape: f32[2,4,8,288], index: 3, kind: output, shape index: {}]
  %s4 = sld [smem:[#allocation0]]
  $region53: #{tpu_custom_call.1} parent=0
    _
  %s6 = ssub.s32 1, %s4
  %s7 = scalar_select 0, %s6, %s4
  $region1: #{tpu_custom_call.1} parent=0
    #allocation3 [shape = 'u8[12288]{0}', space=vmem, size = 0x3000, scoped, tag = 'input window, operand 0']
    #allocation4 [shape = 's32[2]{0}', space=sflag, size = 0x8, scoped, tag = 'scoped memory for tpu_custom_call.1']
    #allocation5 [shape = 's32[2]{0}', space=sflag, size = 0x8, scoped, tag = 'scoped memory for tpu_custom_call.1']
    #allocation6 [shape = 'u8[16384]{0}', space=vmem, size = 0x4000, scoped, tag = 'input window, operand 1, single buffered']
    #allocation7 [shape = 's32[1]{0}', space=sflag, size = 0x4, scoped, tag = 'scoped memory for tpu_custom_call.1']
    #allocation8 [shape = 'u8[98304]{0}', space=vmem, size = 0x18000, scoped, tag = 'output window, operand 0']
    %8 = vsyncpa [#allocation4], 0
    %s9 = scalar_lea.sflag [#allocation4], 1
    %10 = vsyncpa %s9, 0
    %11 = vsyncpa [#allocation7], 0
    %12 = vsyncpa [#allocation5], 0
    %s13 = scalar_lea.sflag [#allocation5], 1
    %14 = vsyncpa %s13, 0
    loop: start=0, step=1, limit=4
    $region2: #{tpu_custom_call.1} parent=1 // loop_pre_header
      _
    $region3: #{tpu_custom_call.1} parent=1 // loop_header
      %s16 = sphi 0, %s20
      %p17 = scmp.ge.s32.totalorder %s16, 4
      %s26 = sphi 0, %s28
      %s29 = sphi 0, %s26
      %s30 = sphi 0, %s29
      %s46 = sphi 0, %s30
      %s50 = sphi 0, %s50
      %s52 = sphi 0, %s50
      %s53 = sphi 0, %s52
      %s67 = sphi 0, %s53
      %s71 = sphi 0, %s71
      %s73 = sphi 0, %s71
      %s74 = sphi 0, %s73
      %s88 = sphi 0, %s74
      %s94 = sphi 0, %s96
      %s97 = sphi 0, %s94
      %s98 = sphi 0, %s97
      %s114 = sphi 0, %s98
    $region4: #{tpu_custom_call.1} parent=1 // loop_header_branch
      %19 = sbr.rel (%p17) target = $region8
    $region5: #{tpu_custom_call.1} parent=1 // loop_body
      %s21 = ssub.s32 %s16, 1
      %s22 = ssub.s32 %s16, 2
      %s23 = sadd.s32 %s16, 1
      %s24 = ssub.s32 %s16, %s23
      %p25 = scmp.eq.s32.totalorder %s24, 0
      %s27 = sadd.s32 %s26, 1
      %s28 = scalar_select %p25, %s26, %s27
      %p31 = pneg %p25
      %p32 = scmp.eq.s32.totalorder %s16, 1
      %p33 = por %p31, %p32
      %p34 = scmp.ne.s32.totalorder %s26, %s29
      %p35 = scmp.eq.s32.totalorder %s16, 0
      %p36 = por %p34, %p35
      %p37 = scmp.ne.s32.totalorder %s26, %s29
      %p38 = scmp.eq.s32.totalorder %s21, 1
      %p39 = por %p37, %p38
      %p40 = scmp.ne.s32.totalorder %s29, %s30
      %p41 = scmp.eq.s32.totalorder %s21, 0
      %p42 = por %p40, %p41
      %p43 = scmp.ne.s32.totalorder %s29, %s30
      %p44 = scmp.eq.s32.totalorder %s22, 1
      %p45 = por %p43, %p44
      %p47 = scmp.ne.s32.totalorder %s30, %s46
      %p48 = scmp.eq.s32.totalorder %s22, 0
      %p49 = por %p47, %p48
      %s51 = sadd.s32 %s50, 1
      %p54 = scmp.eq.s32.totalorder %s16, 1
      %p55 = scmp.ne.s32.totalorder %s50, %s52
      %p56 = scmp.eq.s32.totalorder %s16, 0
      %p57 = por %p55, %p56
      %p58 = scmp.ne.s32.totalorder %s50, %s52
      %p59 = scmp.eq.s32.totalorder %s21, 1
      %p60 = por %p58, %p59
      %p61 = scmp.ne.s32.totalorder %s52, %s53
      %p62 = scmp.eq.s32.totalorder %s21, 0
      %p63 = por %p61, %p62
      %p64 = scmp.ne.s32.totalorder %s52, %s53
      %p65 = scmp.eq.s32.totalorder %s22, 1
      %p66 = por %p64, %p65
      %p68 = scmp.ne.s32.totalorder %s53, %s67
      %p69 = scmp.eq.s32.totalorder %s22, 0
      %p70 = por %p68, %p69
      %s72 = sadd.s32 %s71, 1
      %p75 = scmp.eq.s32.totalorder %s16, 1
      %p76 = scmp.ne.s32.totalorder %s71, %s73
      %p77 = scmp.eq.s32.totalorder %s16, 0
      %p78 = por %p76, %p77
      %p79 = scmp.ne.s32.totalorder %s71, %s73
      %p80 = scmp.eq.s32.totalorder %s21, 1
      %p81 = por %p79, %p80
      %p82 = scmp.ne.s32.totalorder %s73, %s74
      %p83 = scmp.eq.s32.totalorder %s21, 0
      %p84 = por %p82, %p83
      %p85 = scmp.ne.s32.totalorder %s73, %s74
      %p86 = scmp.eq.s32.totalorder %s22, 1
      %p87 = por %p85, %p86
      %p89 = scmp.ne.s32.totalorder %s74, %s88
      %p90 = scmp.eq.s32.totalorder %s22, 0
      %p91 = por %p89, %p90
      %s92 = ssub.s32 %s16, %s23
      %p93 = scmp.eq.s32.totalorder %s92, 0
      %s95 = sadd.s32 %s94, 1
      %s96 = scalar_select %p93, %s94, %s95
      %p99 = pneg %p93
      %p100 = scmp.eq.s32.totalorder %s16, 1
      %p101 = por %p99, %p100
      %p102 = scmp.ne.s32.totalorder %s94, %s97
      %p103 = scmp.eq.s32.totalorder %s16, 0
      %p104 = por %p102, %p103
      %p105 = scmp.ne.s32.totalorder %s94, %s97
      %p106 = scmp.eq.s32.totalorder %s21, 1
      %p107 = por %p105, %p106
      %p108 = scmp.ne.s32.totalorder %s97, %s98
      %p109 = scmp.eq.s32.totalorder %s21, 0
      %p110 = por %p108, %p109
      %p111 = scmp.ne.s32.totalorder %s97, %s98
      %p112 = scmp.eq.s32.totalorder %s22, 1
      %p113 = por %p111, %p112
      %p115 = scmp.ne.s32.totalorder %s98, %s114
      %p116 = scmp.eq.s32.totalorder %s22, 0
      %p117 = por %p115, %p116
      %p118 = scmp.le.s32.totalorder 1, %s16
      %p119 = scmp.lt.s32.totalorder %s16, 3
      %p120 = pnand %p118, %p119
      %p121 = pneg %p120
      // Predicated region
      $region9: #{tpu_custom_call.1} parent=5 // pred_check
        _
      $region10: #{tpu_custom_call.1} parent=5 // pred_check_branch
        %123 = sbr.rel (%p120) target = $region12
      $region11: #{tpu_custom_call.1} parent=5 // pred_region
        %s124 = ssub.s32 %s16, 1
        // Predicated region
        $region13: #{tpu_custom_call.1} parent=11 // pred_check
          %p125 = pneg %p63
        $region14: #{tpu_custom_call.1} parent=11 // pred_check_branch
          %127 = sbr.rel (%p125) target = $region16
        $region15: #{tpu_custom_call.1} parent=11 // pred_region
          %s129 = ssub.s32 512, 512
          %130 = vsyncadd [#allocation7], %s129
          %s131 = sshll.u32 [#allocation6], 4
          %s132 = int_to_ptr.vmem [resolvable:$true] %s131
          %137 = dma.hbm_to_vmem [thread:$0]  %s1, 512, %s132, [#allocation7], 128, 128, 8
        $region16: #{tpu_custom_call.1} parent=11 // pred_fallthru
          _
        // Predicated region
        $region17: #{tpu_custom_call.1} parent=11 // pred_check
          %p138 = pneg %p84
        $region18: #{tpu_custom_call.1} parent=11 // pred_check_branch
          %140 = sbr.rel (%p138) target = $region20
        $region19: #{tpu_custom_call.1} parent=11 // pred_region
          _
        $region20: #{tpu_custom_call.1} parent=11 // pred_fallthru
          _
      $region12: #{tpu_custom_call.1} parent=5 // pred_fallthru
        _
      %p141 = scmp.lt.s32.totalorder %s16, 2
      // Predicated region
      $region21: #{tpu_custom_call.1} parent=5 // pred_check
        %p142 = pneg %p141
      $region22: #{tpu_custom_call.1} parent=5 // pred_check_branch
        %144 = sbr.rel (%p142) target = $region24
      $region23: #{tpu_custom_call.1} parent=5 // pred_region
        // Predicated region
        $region25: #{tpu_custom_call.1} parent=23 // pred_check
          %p145 = pneg %p36
        $region26: #{tpu_custom_call.1} parent=23 // pred_check_branch
          %147 = sbr.rel (%p145) target = $region28
        $region27: #{tpu_custom_call.1} parent=23 // pred_region
          %s148 = sand.u32 %s26, 1
          %s149 = scalar_lea.sflag [#allocation4], %s148
          %s150 = sand.u32 %s26, 1
          %s151 = smul.addr %s150, 12
          %s152 = scalar_lea.vmem [#allocation3], %s151
          %s154 = ssub.s32 192, 192
          %155 = vsyncadd %s149, %s154
          %s156 = smul.addr %s16, 3
          %s157 = smul.addr %s156, 64
          %s158 = scalar_lea.hbm %s0, %s157
          %s160 = sshll.u32 %s152, 4
          %s161 = int_to_ptr.vmem [resolvable:$true] %s160
          %163 = dma.hbm_to_vmem [thread:$0]  %s158, 192, %s161, %s149
        $region28: #{tpu_custom_call.1} parent=23 // pred_fallthru
          _
      $region24: #{tpu_custom_call.1} parent=5 // pred_fallthru
        _
      %p164 = scmp.le.s32.totalorder 1, %s16
      %p165 = scmp.lt.s32.totalorder %s16, 3
      %p166 = pnand %p164, %p165
      %p167 = pneg %p166
      // Predicated region
      $region29: #{tpu_custom_call.1} parent=5 // pred_check
        _
      $region30: #{tpu_custom_call.1} parent=5 // pred_check_branch
        %169 = sbr.rel (%p166) target = $region32
      $region31: #{tpu_custom_call.1} parent=5 // pred_region
        %s170 = ssub.s32 %s16, 1
        %s171 = sand.u32 %s29, 1
        %s172 = scalar_lea.sflag [#allocation4], %s171
        %s173 = sand.u32 %s29, 1
        %s174 = smul.addr %s173, 12
        %s175 = scalar_lea.vmem [#allocation3], %s174
        // Predicated region
        $region33: #{tpu_custom_call.1} parent=31 // pred_check
          %p176 = pneg %p42
        $region34: #{tpu_custom_call.1} parent=31 // pred_check_branch
          %178 = sbr.rel (%p176) target = $region36
        $region35: #{tpu_custom_call.1} parent=31 // pred_region
          %179 = dma.done %s172, 192
        $region36: #{tpu_custom_call.1} parent=31 // pred_fallthru
          _
        // Predicated region
        $region37: #{tpu_custom_call.1} parent=31 // pred_check
          %p180 = pneg %p63
        $region38: #{tpu_custom_call.1} parent=31 // pred_check_branch
          %182 = sbr.rel (%p180) target = $region40
        $region39: #{tpu_custom_call.1} parent=31 // pred_region
          %183 = dma.done [#allocation7], 512
        $region40: #{tpu_custom_call.1} parent=31 // pred_fallthru
          _
        %s184 = sand.u32 %s29, 1
        %s185 = scalar_lea.sflag [#allocation4], %s184
        %s186 = sand.u32 %s29, 1
        %s187 = smul.addr %s186, 12
        %s188 = scalar_lea.vmem [#allocation3], %s187
        %p189 = pneg %p42
        %p190 = pneg %p39
        %p191 = pneg %p63
        %p192 = pneg %p60
        %p193 = pneg %p84
        %p194 = pneg %p81
        %p195 = pneg %p110
        %p196 = pneg %p107
        %s197 = sand.u32 %s97, 1
        %s198 = scalar_lea.sflag [#allocation5], %s197
        %s199 = sand.u32 %s97, 1
        %s200 = smul.addr %s199, 96
        %s201 = scalar_lea.vmem [#allocation8], %s200
        %v202 = vld [vmem:[%s2] sm:$0xff]
        %v203 = vld [vmem:[%s175] sm:$0xff]
        %v204 = vld [vmem:[%s175 + $0x8] sm:$0xf]
        %v206 = vcombine.high %v203, %v203
        %208 = vst [vmem:[#allocation2] sm:$0xf] %v203
        %209 = vst [vmem:[#allocation2 + $0x8] sm:$0xf] %v206
        %vm210 = vcmask 257024
        %211 = vst.msk [vmem:[#allocation2 + $0x10] sm:$0xf] %vm210, %v204
        %v212 = vld [vmem:[%s175] sm:$0xff]
        %v213 = vld [vmem:[%s175 + $0x8] sm:$0xf]
        %v216 = vcombine.low %v212, %v212
        %v217 = vcombine.low %v213, %v213
        %218 = vrot.lane.b32.xlu0 %v216, 127
        %v219 = vpop.permute.xlu0 %218
        %220 = vrot.lane.b32.xlu0 %v212, 127
        %v221 = vpop.permute.xlu0 %220
        %222 = vrot.lane.b32.xlu0 %v217, 127
        %v223 = vpop.permute.xlu0 %222
        %vm224 = vcmask 1039360
        %v225 = vsel %vm224, %v219, %v221
        %v226 = vsel %vm224, %v221, %v223
        %230 = vst [vmem:[#allocation2] sm:$0xf0] %v225
        %231 = vst [vmem:[#allocation2 + $0x8] sm:$0xf0] %v226
        %vm232 = vcmask 261124
        %233 = vst.msk [vmem:[#allocation2 + $0x10] sm:$0xf0] %vm232, %v223
        %v234 = vld [vmem:[%s175] sm:$0xff]
        %v235 = vld [vmem:[%s175 + $0x8] sm:$0xf]
        %v238 = vcombine.high %v234, %v234
        %239 = vrot.lane.b32.xlu0 %v234, 110
        %v240 = vpop.permute.xlu0 %239
        %241 = vrot.lane.b32.xlu0 %v238, 110
        %v242 = vpop.permute.xlu0 %241
        %243 = vrot.lane.b32.xlu0 %v235, 110
        %v244 = vpop.permute.xlu0 %243
        %vm245 = vcmask 900096
        %v246 = vsel %vm245, %v240, %v242
        %v247 = vsel %vm245, %v242, %v244
        %251 = vst [vmem:[#allocation2 + $0x18] sm:$0xf] %v246
        %252 = vst [vmem:[#allocation2 + $0x20] sm:$0xf] %v247
        %253 = vst.msk [vmem:[#allocation2 + $0x28] sm:$0xf] %vm210, %v244
        %v254 = vld [vmem:[%s175] sm:$0xff]
        %v255 = vld [vmem:[%s175 + $0x8] sm:$0xf]
        %v258 = vcombine.low %v254, %v254
        %v259 = vcombine.low %v255, %v255
        %260 = vrot.lane.b32.xlu0 %v258, 109
        %v261 = vpop.permute.xlu0 %260
        %262 = vrot.lane.b32.xlu0 %v254, 109
        %v263 = vpop.permute.xlu0 %262
        %264 = vrot.lane.b32.xlu0 %v259, 109
        %v265 = vpop.permute.xlu0 %264
        %vm266 = vcmask 891904
        %v267 = vsel %vm266, %v261, %v263
        %v268 = vsel %vm266, %v263, %v265
        %272 = vst [vmem:[#allocation2 + $0x18] sm:$0xf0] %v267
        %273 = vst [vmem:[#allocation2 + $0x20] sm:$0xf0] %v268
        %274 = vst.msk [vmem:[#allocation2 + $0x28] sm:$0xf0] %vm232, %v265
        %v275 = vld [vmem:[#allocation6] sm:$0xff]
        %v276 = vld [vmem:[#allocation2] sm:$0xff]
        %v277 = vld [vmem:[#allocation2 + $0x8] sm:$0xff]
        %v278 = vld [vmem:[#allocation2 + $0x10] sm:$0xff]
        %v279 = vld [vmem:[#allocation2 + $0x18] sm:$0xff]
        %v280 = vld [vmem:[#allocation2 + $0x20] sm:$0xff]
        %v281 = vld [vmem:[#allocation2 + $0x28] sm:$0xff]
        %283 = vset.pattern.permute.xlu0 0
        %284 = vperm.xlu0 %283, %v202
        %v285 = vpop.permute.xlu0 %284
        %vm287 = vcmask 130048
        %v289 = vsel %vm287, %v275, 0
        %291 = vmatprep.subr.mxu0 %v277
        %292 = vmatpush1.msra.mxu0 %v276
        %293 = vmatprep.subr.mxu0 %v280
        %294 = vmatpush1.msra.mxu0 %v279
        %295 = vmatprep.subr.mxu0 0.0
        %296 = vmatpush1.msra.mxu0 0.0
        %297 = vmatprep.subr.mxu0 0.0
        %298 = vmatpush1.msra.mxu0 0.0
        %299 = vmatprep.subr.mxu0 0.0
        %300 = vmatpush1.msra.mxu0 0.0
        %301 = vmatprep.subr.mxu0 0.0
        %302 = vmatpush1.msra.mxu0 0.0
        %303 = vmatprep.subr.mxu0 0.0
        %304 = vmatpush1.msra.mxu0 0.0
        %305 = vmatprep.subr.mxu0 0.0
        %306 = vmatpush1.msra.mxu0 0.0
        %307 = vmatprep.subr.mxu0 0.0
        %308 = vmatpush1.msra.mxu0 0.0
        %309 = vmatprep.subr.mxu0 0.0
        %310 = vmatpush1.msra.mxu0 0.0
        %311 = vmatprep.subr.mxu0 0.0
        %312 = vmatpush1.msra.mxu0 0.0
        %313 = vmatprep.subr.mxu0 0.0
        %314 = vmatpush1.msra.mxu0 0.0
        %315 = vmatprep.subr.mxu0 0.0
        %316 = vmatpush1.msra.mxu0 0.0
        %317 = vmatprep.subr.mxu0 0.0
        %318 = vmatpush1.msra.mxu0 0.0
        %319 = vmatprep.subr.mxu0 0.0
        %320 = vmatpush1.msra.mxu0 0.0
        %321 = vmatprep.subr.mxu0 0.0
        %322 = vmatpush1.msra.mxu0 0.0
        %323 = vmatprep.subr.mxu0 0.0
        %324 = vmatpush1.msra.mxu0 0.0
        %325 = vmatprep.subr.mxu0 0.0
        %326 = vmatpush1.msra.mxu0 0.0
        %327 = vmatprep.subr.mxu0 0.0
        %328 = vmatpush1.msra.mxu0 0.0
        %329 = vmatprep.subr.mxu0 0.0
        %330 = vmatpush1.msra.mxu0 0.0
        %331 = vmatprep.subr.mxu0 0.0
        %332 = vmatpush1.msra.mxu0 0.0
        %333 = vmatprep.subr.mxu0 0.0
        %334 = vmatpush1.msra.mxu0 0.0
        %335 = vmatprep.subr.mxu0 0.0
        %336 = vmatpush1.msra.mxu0 0.0
        %337 = vmatprep.subr.mxu0 0.0
        %338 = vmatpush1.msra.mxu0 0.0
        %339 = vmatprep.subr.mxu0 0.0
        %340 = vmatpush1.msra.mxu0 0.0
        %341 = vmatprep.subr.mxu0 0.0
        %342 = vmatpush1.msra.mxu0 0.0
        %343 = vmatprep.subr.mxu0 0.0
        %344 = vmatpush1.msra.mxu0 0.0
        %345 = vmatprep.subr.mxu0 0.0
        %346 = vmatpush1.msra.mxu0 0.0
        %347 = vmatprep.subr.mxu0 0.0
        %348 = vmatpush1.msra.mxu0 0.0
        %349 = vmatprep.subr.mxu0 0.0
        %350 = vmatpush1.msra.mxu0 0.0
        %351 = vmatprep.subr.mxu0 0.0
        %352 = vmatpush1.msra.mxu0 0.0
        %353 = vmatprep.subr.mxu0 0.0
        %354 = vmatpush1.msra.mxu0 0.0
        %355 = vmatprep.mubr.f32.mxu0 0.0
        %356 = vmatmul.mubr.f32.gmra.mrb[0].mxu0 %v289
        %v357 = vpop.f32.mrb[0].mxu0
        %v358 = vadd.f32 %v285, %v357
        %v359 = vpop.f32.mrb[0].mxu0
        %v360 = vadd.f32 %v285, %v359
        %361 = vdwg.mxu0
        %362 = vmatprep.subr.mxu0 0.0
        %363 = vmatpush1.msra.mxu0 %v278
        %364 = vmatprep.subr.mxu0 0.0
        %365 = vmatpush1.msra.mxu0 %v281
        %366 = vmatprep.subr.mxu0 0.0
        %367 = vmatpush1.msra.mxu0 0.0
        %368 = vmatprep.subr.mxu0 0.0
        %369 = vmatpush1.msra.mxu0 0.0
        %370 = vmatprep.subr.mxu0 0.0
        %371 = vmatpush1.msra.mxu0 0.0
        %372 = vmatprep.subr.mxu0 0.0
        %373 = vmatpush1.msra.mxu0 0.0
        %374 = vmatprep.subr.mxu0 0.0
        %375 = vmatpush1.msra.mxu0 0.0
        %376 = vmatprep.subr.mxu0 0.0
        %377 = vmatpush1.msra.mxu0 0.0
        %378 = vmatprep.subr.mxu0 0.0
        %379 = vmatpush1.msra.mxu0 0.0
        %380 = vmatprep.subr.mxu0 0.0
        %381 = vmatpush1.msra.mxu0 0.0
        %382 = vmatprep.subr.mxu0 0.0
        %383 = vmatpush1.msra.mxu0 0.0
        %384 = vmatprep.subr.mxu0 0.0
        %385 = vmatpush1.msra.mxu0 0.0
        %386 = vmatprep.subr.mxu0 0.0
        %387 = vmatpush1.msra.mxu0 0.0
        %388 = vmatprep.subr.mxu0 0.0
        %389 = vmatpush1.msra.mxu0 0.0
        %390 = vmatprep.subr.mxu0 0.0
        %391 = vmatpush1.msra.mxu0 0.0
        %392 = vmatprep.subr.mxu0 0.0
        %393 = vmatpush1.msra.mxu0 0.0
        %394 = vmatprep.subr.mxu0 0.0
        %395 = vmatpush1.msra.mxu0 0.0
        %396 = vmatprep.subr.mxu0 0.0
        %397 = vmatpush1.msra.mxu0 0.0
        %398 = vmatprep.subr.mxu0 0.0
        %399 = vmatpush1.msra.mxu0 0.0
        %400 = vmatprep.subr.mxu0 0.0
        %401 = vmatpush1.msra.mxu0 0.0
        %402 = vmatprep.subr.mxu0 0.0
        %403 = vmatpush1.msra.mxu0 0.0
        %404 = vmatprep.subr.mxu0 0.0
        %405 = vmatpush1.msra.mxu0 0.0
        %406 = vmatprep.subr.mxu0 0.0
        %407 = vmatpush1.msra.mxu0 0.0
        %408 = vmatprep.subr.mxu0 0.0
        %409 = vmatpush1.msra.mxu0 0.0
        %410 = vmatprep.subr.mxu0 0.0
        %411 = vmatpush1.msra.mxu0 0.0
        %412 = vmatprep.subr.mxu0 0.0
        %413 = vmatpush1.msra.mxu0 0.0
        %414 = vmatprep.subr.mxu0 0.0
        %415 = vmatpush1.msra.mxu0 0.0
        %416 = vmatprep.subr.mxu0 0.0
        %417 = vmatpush1.msra.mxu0 0.0
        %418 = vmatprep.subr.mxu0 0.0
        %419 = vmatpush1.msra.mxu0 0.0
        %420 = vmatprep.subr.mxu0 0.0
        %421 = vmatpush1.msra.mxu0 0.0
        %422 = vmatprep.subr.mxu0 0.0
        %423 = vmatpush1.msra.mxu0 0.0
        %424 = vmatprep.subr.mxu0 0.0
        %425 = vmatpush1.msra.mxu0 0.0
        %426 = vmatprep.mubr.f32.mxu0 0.0
        %427 = vmatmul.mubr.f32.gmra.mrb[0].mxu0 %v289
        %v428 = vpop.f32.mrb[0].mxu0
        %v429 = vadd.f32 %v285, %v428
        %v430 = vpop.f32.mrb[0].mxu0
        %431 = vdwg.mxu0
        %432 = vst [vmem:[%s201] sm:$0xff] %v358
        %433 = vst [vmem:[%s201 + $0x8] sm:$0xff] %v360
        %vm434 = vcmask 261120
        %435 = vst.msk [vmem:[%s201 + $0x10] sm:$0xff] %vm434, %v429
        %v436 = vld [vmem:[%s175] sm:$0xff]
        %v437 = vld [vmem:[%s175 + $0x8] sm:$0xf]
        %v440 = vcombine.high %v436, %v436
        %441 = vrot.lane.b32.xlu0 %v436, 127
        %v442 = vpop.permute.xlu0 %441
        %443 = vrot.lane.b32.xlu0 %v440, 127
        %v444 = vpop.permute.xlu0 %443
        %445 = vrot.lane.b32.xlu0 %v437, 127
        %v446 = vpop.permute.xlu0 %445
        %v447 = vsel %vm224, %v442, %v444
        %v448 = vsel %vm224, %v444, %v446
        %452 = vst [vmem:[#allocation2] sm:$0xf] %v447
        %453 = vst [vmem:[#allocation2 + $0x8] sm:$0xf] %v448
        %454 = vst.msk [vmem:[#allocation2 + $0x10] sm:$0xf] %vm210, %v446
        %v455 = vld [vmem:[%s175] sm:$0xff]
        %v456 = vld [vmem:[%s175 + $0x8] sm:$0xf]
        %v459 = vcombine.low %v455, %v455
        %v460 = vcombine.low %v456, %v456
        %461 = vrot.lane.b32.xlu0 %v459, 126
        %v462 = vpop.permute.xlu0 %461
        %463 = vrot.lane.b32.xlu0 %v455, 126
        %v464 = vpop.permute.xlu0 %463
        %465 = vrot.lane.b32.xlu0 %v460, 126
        %v466 = vpop.permute.xlu0 %465
        %vm467 = vcmask 1031168
        %v468 = vsel %vm467, %v462, %v464
        %v469 = vsel %vm467, %v464, %v466
        %473 = vst [vmem:[#allocation2] sm:$0xf0] %v468
        %474 = vst [vmem:[#allocation2 + $0x8] sm:$0xf0] %v469
        %475 = vst.msk [vmem:[#allocation2 + $0x10] sm:$0xf0] %vm232, %v466
        %v476 = vld [vmem:[%s175] sm:$0xff]
        %v477 = vld [vmem:[%s175 + $0x8] sm:$0xf]
        %v480 = vcombine.high %v476, %v476
        %481 = vrot.lane.b32.xlu0 %v476, 109
        %v482 = vpop.permute.xlu0 %481
        %483 = vrot.lane.b32.xlu0 %v480, 109
        %v484 = vpop.permute.xlu0 %483
        %485 = vrot.lane.b32.xlu0 %v477, 109
        %v486 = vpop.permute.xlu0 %485
        %v487 = vsel %vm266, %v482, %v484
        %v488 = vsel %vm266, %v484, %v486
        %492 = vst [vmem:[#allocation2 + $0x18] sm:$0xf] %v487
        %493 = vst [vmem:[#allocation2 + $0x20] sm:$0xf] %v488
        %494 = vst.msk [vmem:[#allocation2 + $0x28] sm:$0xf] %vm210, %v486
        %v495 = vld [vmem:[%s175] sm:$0xff]
        %v496 = vld [vmem:[%s175 + $0x8] sm:$0xf]
        %v499 = vcombine.low %v495, %v495
        %v500 = vcombine.low %v496, %v496
        %501 = vrot.lane.b32.xlu0 %v499, 108
        %v502 = vpop.permute.xlu0 %501
        %503 = vrot.lane.b32.xlu0 %v495, 108
        %v504 = vpop.permute.xlu0 %503
        %505 = vrot.lane.b32.xlu0 %v500, 108
        %v506 = vpop.permute.xlu0 %505
        %vm507 = vcmask 883712
        %v508 = vsel %vm507, %v502, %v504
        %v509 = vsel %vm507, %v504, %v506
        %513 = vst [vmem:[#allocation2 + $0x18] sm:$0xf0] %v508
        %514 = vst [vmem:[#allocation2 + $0x20] sm:$0xf0] %v509
        %515 = vst.msk [vmem:[#allocation2 + $0x28] sm:$0xf0] %vm232, %v506
        %s516 = scalar_lea.vmem [#allocation6], 8
        %v517 = vld [vmem:[%s516] sm:$0xff]
        %v518 = vld [vmem:[#allocation2] sm:$0xff]
        %v519 = vld [vmem:[#allocation2 + $0x8] sm:$0xff]
        %v520 = vld [vmem:[#allocation2 + $0x10] sm:$0xff]
        %v521 = vld [vmem:[#allocation2 + $0x18] sm:$0xff]
        %v522 = vld [vmem:[#allocation2 + $0x20] sm:$0xff]
        %v523 = vld [vmem:[#allocation2 + $0x28] sm:$0xff]
        %v525 = vsel %vm287, %v517, 0
        %527 = vmatprep.subr.mxu0 %v519
        %528 = vmatpush1.msra.mxu0 %v518
        %529 = vmatprep.subr.mxu0 %v522
        %530 = vmatpush1.msra.mxu0 %v521
        %531 = vmatprep.subr.mxu0 0.0
        %532 = vmatpush1.msra.mxu0 0.0
        %533 = vmatprep.subr.mxu0 0.0
        %534 = vmatpush1.msra.mxu0 0.0
        %535 = vmatprep.subr.mxu0 0.0
        %536 = vmatpush1.msra.mxu0 0.0
        %537 = vmatprep.subr.mxu0 0.0
        %538 = vmatpush1.msra.mxu0 0.0
        %539 = vmatprep.subr.mxu0 0.0
        %540 = vmatpush1.msra.mxu0 0.0
        %541 = vmatprep.subr.mxu0 0.0
        %542 = vmatpush1.msra.mxu0 0.0
        %543 = vmatprep.subr.mxu0 0.0
        %544 = vmatpush1.msra.mxu0 0.0
        %545 = vmatprep.subr.mxu0 0.0
        %546 = vmatpush1.msra.mxu0 0.0
        %547 = vmatprep.subr.mxu0 0.0
        %548 = vmatpush1.msra.mxu0 0.0
        %549 = vmatprep.subr.mxu0 0.0
        %550 = vmatpush1.msra.mxu0 0.0
        %551 = vmatprep.subr.mxu0 0.0
        %552 = vmatpush1.msra.mxu0 0.0
        %553 = vmatprep.subr.mxu0 0.0
        %554 = vmatpush1.msra.mxu0 0.0
        %555 = vmatprep.subr.mxu0 0.0
        %556 = vmatpush1.msra.mxu0 0.0
        %557 = vmatprep.subr.mxu0 0.0
        %558 = vmatpush1.msra.mxu0 0.0
        %559 = vmatprep.subr.mxu0 0.0
        %560 = vmatpush1.msra.mxu0 0.0
        %561 = vmatprep.subr.mxu0 0.0
        %562 = vmatpush1.msra.mxu0 0.0
        %563 = vmatprep.subr.mxu0 0.0
        %564 = vmatpush1.msra.mxu0 0.0
        %565 = vmatprep.subr.mxu0 0.0
        %566 = vmatpush1.msra.mxu0 0.0
        %567 = vmatprep.subr.mxu0 0.0
        %568 = vmatpush1.msra.mxu0 0.0
        %569 = vmatprep.subr.mxu0 0.0
        %570 = vmatpush1.msra.mxu0 0.0
        %571 = vmatprep.subr.mxu0 0.0
        %572 = vmatpush1.msra.mxu0 0.0
        %573 = vmatprep.subr.mxu0 0.0
        %574 = vmatpush1.msra.mxu0 0.0
        %575 = vmatprep.subr.mxu0 0.0
        %576 = vmatpush1.msra.mxu0 0.0
        %577 = vmatprep.subr.mxu0 0.0
        %578 = vmatpush1.msra.mxu0 0.0
        %579 = vmatprep.subr.mxu0 0.0
        %580 = vmatpush1.msra.mxu0 0.0
        %581 = vmatprep.subr.mxu0 0.0
        %582 = vmatpush1.msra.mxu0 0.0
        %583 = vmatprep.subr.mxu0 0.0
        %584 = vmatpush1.msra.mxu0 0.0
        %585 = vmatprep.subr.mxu0 0.0
        %586 = vmatpush1.msra.mxu0 0.0
        %587 = vmatprep.subr.mxu0 0.0
        %588 = vmatpush1.msra.mxu0 0.0
        %589 = vmatprep.subr.mxu0 0.0
        %590 = vmatpush1.msra.mxu0 0.0
        %591 = vmatprep.mubr.f32.mxu0 0.0
        %592 = vmatmul.mubr.f32.gmra.mrb[0].mxu0 %v525
        %v593 = vpop.f32.mrb[0].mxu0
        %v594 = vadd.f32 %v285, %v593
        %v595 = vpop.f32.mrb[0].mxu0
        %v596 = vadd.f32 %v285, %v595
        %597 = vdwg.mxu0
        %598 = vmatprep.subr.mxu0 0.0
        %599 = vmatpush1.msra.mxu0 %v520
        %600 = vmatprep.subr.mxu0 0.0
        %601 = vmatpush1.msra.mxu0 %v523
        %602 = vmatprep.subr.mxu0 0.0
        %603 = vmatpush1.msra.mxu0 0.0
        %604 = vmatprep.subr.mxu0 0.0
        %605 = vmatpush1.msra.mxu0 0.0
        %606 = vmatprep.subr.mxu0 0.0
        %607 = vmatpush1.msra.mxu0 0.0
        %608 = vmatprep.subr.mxu0 0.0
        %609 = vmatpush1.msra.mxu0 0.0
        %610 = vmatprep.subr.mxu0 0.0
        %611 = vmatpush1.msra.mxu0 0.0
        %612 = vmatprep.subr.mxu0 0.0
        %613 = vmatpush1.msra.mxu0 0.0
        %614 = vmatprep.subr.mxu0 0.0
        %615 = vmatpush1.msra.mxu0 0.0
        %616 = vmatprep.subr.mxu0 0.0
        %617 = vmatpush1.msra.mxu0 0.0
        %618 = vmatprep.subr.mxu0 0.0
        %619 = vmatpush1.msra.mxu0 0.0
        %620 = vmatprep.subr.mxu0 0.0
        %621 = vmatpush1.msra.mxu0 0.0
        %622 = vmatprep.subr.mxu0 0.0
        %623 = vmatpush1.msra.mxu0 0.0
        %624 = vmatprep.subr.mxu0 0.0
        %625 = vmatpush1.msra.mxu0 0.0
        %626 = vmatprep.subr.mxu0 0.0
        %627 = vmatpush1.msra.mxu0 0.0
        %628 = vmatprep.subr.mxu0 0.0
        %629 = vmatpush1.msra.mxu0 0.0
        %630 = vmatprep.subr.mxu0 0.0
        %631 = vmatpush1.msra.mxu0 0.0
        %632 = vmatprep.subr.mxu0 0.0
        %633 = vmatpush1.msra.mxu0 0.0
        %634 = vmatprep.subr.mxu0 0.0
        %635 = vmatpush1.msra.mxu0 0.0
        %636 = vmatprep.subr.mxu0 0.0
        %637 = vmatpush1.msra.mxu0 0.0
        %638 = vmatprep.subr.mxu0 0.0
        %639 = vmatpush1.msra.mxu0 0.0
        %640 = vmatprep.subr.mxu0 0.0
        %641 = vmatpush1.msra.mxu0 0.0
        %642 = vmatprep.subr.mxu0 0.0
        %643 = vmatpush1.msra.mxu0 0.0
        %644 = vmatprep.subr.mxu0 0.0
        %645 = vmatpush1.msra.mxu0 0.0
        %646 = vmatprep.subr.mxu0 0.0
        %647 = vmatpush1.msra.mxu0 0.0
        %648 = vmatprep.subr.mxu0 0.0
        %649 = vmatpush1.msra.mxu0 0.0
        %650 = vmatprep.subr.mxu0 0.0
        %651 = vmatpush1.msra.mxu0 0.0
        %652 = vmatprep.subr.mxu0 0.0
        %653 = vmatpush1.msra.mxu0 0.0
        %654 = vmatprep.subr.mxu0 0.0
        %655 = vmatpush1.msra.mxu0 0.0
        %656 = vmatprep.subr.mxu0 0.0
        %657 = vmatpush1.msra.mxu0 0.0
        %658 = vmatprep.subr.mxu0 0.0
        %659 = vmatpush1.msra.mxu0 0.0
        %660 = vmatprep.subr.mxu0 0.0
        %661 = vmatpush1.msra.mxu0 0.0
        %662 = vmatprep.mubr.f32.mxu0 0.0
        %663 = vmatmul.mubr.f32.gmra.mrb[0].mxu0 %v525
        %v664 = vpop.f32.mrb[0].mxu0
        %v665 = vadd.f32 %v285, %v664
        %v666 = vpop.f32.mrb[0].mxu0
        %667 = vdwg.mxu0
        %s668 = scalar_lea.vmem %s201, 24 [#allocation8]
        %669 = vst [vmem:[%s668] sm:$0xff] %v594
        %670 = vst [vmem:[%s668 + $0x8] sm:$0xff] %v596
        %671 = vst.msk [vmem:[%s668 + $0x10] sm:$0xff] %vm434, %v665
        %v672 = vld [vmem:[%s175] sm:$0xff]
        %v673 = vld [vmem:[%s175 + $0x8] sm:$0xf]
        %v676 = vcombine.high %v672, %v672
        %677 = vrot.lane.b32.xlu0 %v672, 110
        %v678 = vpop.permute.xlu0 %677
        %679 = vrot.lane.b32.xlu0 %v676, 110
        %v680 = vpop.permute.xlu0 %679
        %681 = vrot.lane.b32.xlu0 %v673, 110
        %v682 = vpop.permute.xlu0 %681
        %v683 = vsel %vm245, %v678, %v680
        %v684 = vsel %vm245, %v680, %v682
        %688 = vst [vmem:[#allocation2] sm:$0xf] %v683
        %689 = vst [vmem:[#allocation2 + $0x8] sm:$0xf] %v684
        %690 = vst.msk [vmem:[#allocation2 + $0x10] sm:$0xf] %vm210, %v682
        %v691 = vld [vmem:[%s175] sm:$0xff]
        %v692 = vld [vmem:[%s175 + $0x8] sm:$0xf]
        %v695 = vcombine.low %v691, %v691
        %v696 = vcombine.low %v692, %v692
        %697 = vrot.lane.b32.xlu0 %v695, 109
        %v698 = vpop.permute.xlu0 %697
        %699 = vrot.lane.b32.xlu0 %v691, 109
        %v700 = vpop.permute.xlu0 %699
        %701 = vrot.lane.b32.xlu0 %v696, 109
        %v702 = vpop.permute.xlu0 %701
        %v703 = vsel %vm266, %v698, %v700
        %v704 = vsel %vm266, %v700, %v702
        %708 = vst [vmem:[#allocation2] sm:$0xf0] %v703
        %709 = vst [vmem:[#allocation2 + $0x8] sm:$0xf0] %v704
        %710 = vst.msk [vmem:[#allocation2 + $0x10] sm:$0xf0] %vm232, %v702
        %v711 = vld [vmem:[%s175] sm:$0xff]
        %v712 = vld [vmem:[%s175 + $0x8] sm:$0xf]
        %v715 = vcombine.high %v711, %v711
        %716 = vrot.lane.b32.xlu0 %v711, 92
        %v717 = vpop.permute.xlu0 %716
        %718 = vrot.lane.b32.xlu0 %v715, 92
        %v719 = vpop.permute.xlu0 %718
        %720 = vrot.lane.b32.xlu0 %v712, 92
        %v721 = vpop.permute.xlu0 %720
        %vm722 = vcmask 752640
        %v723 = vsel %vm722, %v717, %v719
        %v724 = vsel %vm722, %v719, %v721
        %728 = vst [vmem:[#allocation2 + $0x18] sm:$0xf] %v723
        %729 = vst [vmem:[#allocation2 + $0x20] sm:$0xf] %v724
        %730 = vst.msk [vmem:[#allocation2 + $0x28] sm:$0xf] %vm210, %v721
        %v731 = vld [vmem:[%s175] sm:$0xff]
        %v732 = vld [vmem:[%s175 + $0x8] sm:$0xf]
        %v735 = vcombine.low %v731, %v731
        %v736 = vcombine.low %v732, %v732
        %737 = vrot.lane.b32.xlu0 %v735, 91
        %v738 = vpop.permute.xlu0 %737
        %739 = vrot.lane.b32.xlu0 %v731, 91
        %v740 = vpop.permute.xlu0 %739
        %741 = vrot.lane.b32.xlu0 %v736, 91
        %v742 = vpop.permute.xlu0 %741
        %vm743 = vcmask 744448
        %v744 = vsel %vm743, %v738, %v740
        %v745 = vsel %vm743, %v740, %v742
        %749 = vst [vmem:[#allocation2 + $0x18] sm:$0xf0] %v744
        %750 = vst [vmem:[#allocation2 + $0x20] sm:$0xf0] %v745
        %751 = vst.msk [vmem:[#allocation2 + $0x28] sm:$0xf0] %vm232, %v742
        %s752 = scalar_lea.vmem [#allocation6], 16
        %v753 = vld [vmem:[%s752] sm:$0xff]
        %v754 = vld [vmem:[#allocation2] sm:$0xff]
        %v755 = vld [vmem:[#allocation2 + $0x8] sm:$0xff]
        %v756 = vld [vmem:[#allocation2 + $0x10] sm:$0xff]
        %v757 = vld [vmem:[#allocation2 + $0x18] sm:$0xff]
        %v758 = vld [vmem:[#allocation2 + $0x20] sm:$0xff]
        %v759 = vld [vmem:[#allocation2 + $0x28] sm:$0xff]
        %v761 = vsel %vm287, %v753, 0
        %763 = vmatprep.subr.mxu0 %v755
        %764 = vmatpush1.msra.mxu0 %v754
        %765 = vmatprep.subr.mxu0 %v758
        %766 = vmatpush1.msra.mxu0 %v757
        %767 = vmatprep.subr.mxu0 0.0
        %768 = vmatpush1.msra.mxu0 0.0
        %769 = vmatprep.subr.mxu0 0.0
        %770 = vmatpush1.msra.mxu0 0.0
        %771 = vmatprep.subr.mxu0 0.0
        %772 = vmatpush1.msra.mxu0 0.0
        %773 = vmatprep.subr.mxu0 0.0
        %774 = vmatpush1.msra.mxu0 0.0
        %775 = vmatprep.subr.mxu0 0.0
        %776 = vmatpush1.msra.mxu0 0.0
        %777 = vmatprep.subr.mxu0 0.0
        %778 = vmatpush1.msra.mxu0 0.0
        %779 = vmatprep.subr.mxu0 0.0
        %780 = vmatpush1.msra.mxu0 0.0
        %781 = vmatprep.subr.mxu0 0.0
        %782 = vmatpush1.msra.mxu0 0.0
        %783 = vmatprep.subr.mxu0 0.0
        %784 = vmatpush1.msra.mxu0 0.0
        %785 = vmatprep.subr.mxu0 0.0
        %786 = vmatpush1.msra.mxu0 0.0
        %787 = vmatprep.subr.mxu0 0.0
        %788 = vmatpush1.msra.mxu0 0.0
        %789 = vmatprep.subr.mxu0 0.0
        %790 = vmatpush1.msra.mxu0 0.0
        %791 = vmatprep.subr.mxu0 0.0
        %792 = vmatpush1.msra.mxu0 0.0
        %793 = vmatprep.subr.mxu0 0.0
        %794 = vmatpush1.msra.mxu0 0.0
        %795 = vmatprep.subr.mxu0 0.0
        %796 = vmatpush1.msra.mxu0 0.0
        %797 = vmatprep.subr.mxu0 0.0
        %798 = vmatpush1.msra.mxu0 0.0
        %799 = vmatprep.subr.mxu0 0.0
        %800 = vmatpush1.msra.mxu0 0.0
        %801 = vmatprep.subr.mxu0 0.0
        %802 = vmatpush1.msra.mxu0 0.0
        %803 = vmatprep.subr.mxu0 0.0
        %804 = vmatpush1.msra.mxu0 0.0
        %805 = vmatprep.subr.mxu0 0.0
        %806 = vmatpush1.msra.mxu0 0.0
        %807 = vmatprep.subr.mxu0 0.0
        %808 = vmatpush1.msra.mxu0 0.0
        %809 = vmatprep.subr.mxu0 0.0
        %810 = vmatpush1.msra.mxu0 0.0
        %811 = vmatprep.subr.mxu0 0.0
        %812 = vmatpush1.msra.mxu0 0.0
        %813 = vmatprep.subr.mxu0 0.0
        %814 = vmatpush1.msra.mxu0 0.0
        %815 = vmatprep.subr.mxu0 0.0
        %816 = vmatpush1.msra.mxu0 0.0
        %817 = vmatprep.subr.mxu0 0.0
        %818 = vmatpush1.msra.mxu0 0.0
        %819 = vmatprep.subr.mxu0 0.0
        %820 = vmatpush1.msra.mxu0 0.0
        %821 = vmatprep.subr.mxu0 0.0
        %822 = vmatpush1.msra.mxu0 0.0
        %823 = vmatprep.subr.mxu0 0.0
        %824 = vmatpush1.msra.mxu0 0.0
        %825 = vmatprep.subr.mxu0 0.0
        %826 = vmatpush1.msra.mxu0 0.0
        %827 = vmatprep.mubr.f32.mxu0 0.0
        %828 = vmatmul.mubr.f32.gmra.mrb[0].mxu0 %v761
        %v829 = vpop.f32.mrb[0].mxu0
        %v830 = vadd.f32 %v285, %v829
        %v831 = vpop.f32.mrb[0].mxu0
        %v832 = vadd.f32 %v285, %v831
        %833 = vdwg.mxu0
        %834 = vmatprep.subr.mxu0 0.0
        %835 = vmatpush1.msra.mxu0 %v756
        %836 = vmatprep.subr.mxu0 0.0
        %837 = vmatpush1.msra.mxu0 %v759
        %838 = vmatprep.subr.mxu0 0.0
        %839 = vmatpush1.msra.mxu0 0.0
        %840 = vmatprep.subr.mxu0 0.0
        %841 = vmatpush1.msra.mxu0 0.0
        %842 = vmatprep.subr.mxu0 0.0
        %843 = vmatpush1.msra.mxu0 0.0
        %844 = vmatprep.subr.mxu0 0.0
        %845 = vmatpush1.msra.mxu0 0.0
        %846 = vmatprep.subr.mxu0 0.0
        %847 = vmatpush1.msra.mxu0 0.0
        %848 = vmatprep.subr.mxu0 0.0
        %849 = vmatpush1.msra.mxu0 0.0
        %850 = vmatprep.subr.mxu0 0.0
        %851 = vmatpush1.msra.mxu0 0.0
        %852 = vmatprep.subr.mxu0 0.0
        %853 = vmatpush1.msra.mxu0 0.0
        %854 = vmatprep.subr.mxu0 0.0
        %855 = vmatpush1.msra.mxu0 0.0
        %856 = vmatprep.subr.mxu0 0.0
        %857 = vmatpush1.msra.mxu0 0.0
        %858 = vmatprep.subr.mxu0 0.0
        %859 = vmatpush1.msra.mxu0 0.0
        %860 = vmatprep.subr.mxu0 0.0
        %861 = vmatpush1.msra.mxu0 0.0
        %862 = vmatprep.subr.mxu0 0.0
        %863 = vmatpush1.msra.mxu0 0.0
        %864 = vmatprep.subr.mxu0 0.0
        %865 = vmatpush1.msra.mxu0 0.0
        %866 = vmatprep.subr.mxu0 0.0
        %867 = vmatpush1.msra.mxu0 0.0
        %868 = vmatprep.subr.mxu0 0.0
        %869 = vmatpush1.msra.mxu0 0.0
        %870 = vmatprep.subr.mxu0 0.0
        %871 = vmatpush1.msra.mxu0 0.0
        %872 = vmatprep.subr.mxu0 0.0
        %873 = vmatpush1.msra.mxu0 0.0
        %874 = vmatprep.subr.mxu0 0.0
        %875 = vmatpush1.msra.mxu0 0.0
        %876 = vmatprep.subr.mxu0 0.0
        %877 = vmatpush1.msra.mxu0 0.0
        %878 = vmatprep.subr.mxu0 0.0
        %879 = vmatpush1.msra.mxu0 0.0
        %880 = vmatprep.subr.mxu0 0.0
        %881 = vmatpush1.msra.mxu0 0.0
        %882 = vmatprep.subr.mxu0 0.0
        %883 = vmatpush1.msra.mxu0 0.0
        %884 = vmatprep.subr.mxu0 0.0
        %885 = vmatpush1.msra.mxu0 0.0
        %886 = vmatprep.subr.mxu0 0.0
        %887 = vmatpush1.msra.mxu0 0.0
        %888 = vmatprep.subr.mxu0 0.0
        %889 = vmatpush1.msra.mxu0 0.0
        %890 = vmatprep.subr.mxu0 0.0
        %891 = vmatpush1.msra.mxu0 0.0
        %892 = vmatprep.subr.mxu0 0.0
        %893 = vmatpush1.msra.mxu0 0.0
        %894 = vmatprep.subr.mxu0 0.0
        %895 = vmatpush1.msra.mxu0 0.0
        %896 = vmatprep.subr.mxu0 0.0
        %897 = vmatpush1.msra.mxu0 0.0
        %898 = vmatprep.mubr.f32.mxu0 0.0
        %899 = vmatmul.mubr.f32.gmra.mrb[0].mxu0 %v761
        %v900 = vpop.f32.mrb[0].mxu0
        %v901 = vadd.f32 %v285, %v900
        %v902 = vpop.f32.mrb[0].mxu0
        %903 = vdwg.mxu0
        %s904 = scalar_lea.vmem %s201, 48 [#allocation8]
        %905 = vst [vmem:[%s904] sm:$0xff] %v830
        %906 = vst [vmem:[%s904 + $0x8] sm:$0xff] %v832
        %907 = vst.msk [vmem:[%s904 + $0x10] sm:$0xff] %vm434, %v901
        %v908 = vld [vmem:[%s175] sm:$0xff]
        %v909 = vld [vmem:[%s175 + $0x8] sm:$0xf]
        %v912 = vcombine.high %v908, %v908
        %913 = vrot.lane.b32.xlu0 %v908, 109
        %v914 = vpop.permute.xlu0 %913
        %915 = vrot.lane.b32.xlu0 %v912, 109
        %v916 = vpop.permute.xlu0 %915
        %917 = vrot.lane.b32.xlu0 %v909, 109
        %v918 = vpop.permute.xlu0 %917
        %v919 = vsel %vm266, %v914, %v916
        %v920 = vsel %vm266, %v916, %v918
        %924 = vst [vmem:[#allocation2] sm:$0xf] %v919
        %925 = vst [vmem:[#allocation2 + $0x8] sm:$0xf] %v920
        %926 = vst.msk [vmem:[#allocation2 + $0x10] sm:$0xf] %vm210, %v918
        %v927 = vld [vmem:[%s175] sm:$0xff]
        %v928 = vld [vmem:[%s175 + $0x8] sm:$0xf]
        %v931 = vcombine.low %v927, %v927
        %v932 = vcombine.low %v928, %v928
        %933 = vrot.lane.b32.xlu0 %v931, 108
        %v934 = vpop.permute.xlu0 %933
        %935 = vrot.lane.b32.xlu0 %v927, 108
        %v936 = vpop.permute.xlu0 %935
        %937 = vrot.lane.b32.xlu0 %v932, 108
        %v938 = vpop.permute.xlu0 %937
        %v939 = vsel %vm507, %v934, %v936
        %v940 = vsel %vm507, %v936, %v938
        %944 = vst [vmem:[#allocation2] sm:$0xf0] %v939
        %945 = vst [vmem:[#allocation2 + $0x8] sm:$0xf0] %v940
        %946 = vst.msk [vmem:[#allocation2 + $0x10] sm:$0xf0] %vm232, %v938
        %v947 = vld [vmem:[%s175] sm:$0xff]
        %v948 = vld [vmem:[%s175 + $0x8] sm:$0xf]
        %v951 = vcombine.high %v947, %v947
        %952 = vrot.lane.b32.xlu0 %v947, 91
        %v953 = vpop.permute.xlu0 %952
        %954 = vrot.lane.b32.xlu0 %v951, 91
        %v955 = vpop.permute.xlu0 %954
        %956 = vrot.lane.b32.xlu0 %v948, 91
        %v957 = vpop.permute.xlu0 %956
        %v958 = vsel %vm743, %v953, %v955
        %v959 = vsel %vm743, %v955, %v957
        %963 = vst [vmem:[#allocation2 + $0x18] sm:$0xf] %v958
        %964 = vst [vmem:[#allocation2 + $0x20] sm:$0xf] %v959
        %965 = vst.msk [vmem:[#allocation2 + $0x28] sm:$0xf] %vm210, %v957
        %v966 = vld [vmem:[%s175] sm:$0xff]
        %v967 = vld [vmem:[%s175 + $0x8] sm:$0xf]
        %v970 = vcombine.low %v966, %v966
        %v971 = vcombine.low %v967, %v967
        %972 = vrot.lane.b32.xlu0 %v970, 90
        %v973 = vpop.permute.xlu0 %972
        %974 = vrot.lane.b32.xlu0 %v966, 90
        %v975 = vpop.permute.xlu0 %974
        %976 = vrot.lane.b32.xlu0 %v971, 90
        %v977 = vpop.permute.xlu0 %976
        %vm978 = vcmask 736256
        %v979 = vsel %vm978, %v973, %v975
        %v980 = vsel %vm978, %v975, %v977
        %984 = vst [vmem:[#allocation2 + $0x18] sm:$0xf0] %v979
        %985 = vst [vmem:[#allocation2 + $0x20] sm:$0xf0] %v980
        %986 = vst.msk [vmem:[#allocation2 + $0x28] sm:$0xf0] %vm232, %v977
        %s987 = scalar_lea.vmem [#allocation6], 24
        %v988 = vld [vmem:[%s987] sm:$0xff]
        %v989 = vld [vmem:[#allocation2] sm:$0xff]
        %v990 = vld [vmem:[#allocation2 + $0x8] sm:$0xff]
        %v991 = vld [vmem:[#allocation2 + $0x10] sm:$0xff]
        %v992 = vld [vmem:[#allocation2 + $0x18] sm:$0xff]
        %v993 = vld [vmem:[#allocation2 + $0x20] sm:$0xff]
        %v994 = vld [vmem:[#allocation2 + $0x28] sm:$0xff]
        %v996 = vsel %vm287, %v988, 0
        %998 = vmatprep.subr.mxu0 %v990
        %999 = vmatpush1.msra.mxu0 %v989
        %1000 = vmatprep.subr.mxu0 %v993
        %1001 = vmatpush1.msra.mxu0 %v992
        %1002 = vmatprep.subr.mxu0 0.0
        %1003 = vmatpush1.msra.mxu0 0.0
        %1004 = vmatprep.subr.mxu0 0.0
        %1005 = vmatpush1.msra.mxu0 0.0
        %1006 = vmatprep.subr.mxu0 0.0
        %1007 = vmatpush1.msra.mxu0 0.0
        %1008 = vmatprep.subr.mxu0 0.0
        %1009 = vmatpush1.msra.mxu0 0.0
        %1010 = vmatprep.subr.mxu0 0.0
        %1011 = vmatpush1.msra.mxu0 0.0
        %1012 = vmatprep.subr.mxu0 0.0
        %1013 = vmatpush1.msra.mxu0 0.0
        %1014 = vmatprep.subr.mxu0 0.0
        %1015 = vmatpush1.msra.mxu0 0.0
        %1016 = vmatprep.subr.mxu0 0.0
        %1017 = vmatpush1.msra.mxu0 0.0
        %1018 = vmatprep.subr.mxu0 0.0
        %1019 = vmatpush1.msra.mxu0 0.0
        %1020 = vmatprep.subr.mxu0 0.0
        %1021 = vmatpush1.msra.mxu0 0.0
        %1022 = vmatprep.subr.mxu0 0.0
        %1023 = vmatpush1.msra.mxu0 0.0
        %1024 = vmatprep.subr.mxu0 0.0
        %1025 = vmatpush1.msra.mxu0 0.0
        %1026 = vmatprep.subr.mxu0 0.0
        %1027 = vmatpush1.msra.mxu0 0.0
        %1028 = vmatprep.subr.mxu0 0.0
        %1029 = vmatpush1.msra.mxu0 0.0
        %1030 = vmatprep.subr.mxu0 0.0
        %1031 = vmatpush1.msra.mxu0 0.0
        %1032 = vmatprep.subr.mxu0 0.0
        %1033 = vmatpush1.msra.mxu0 0.0
        %1034 = vmatprep.subr.mxu0 0.0
        %1035 = vmatpush1.msra.mxu0 0.0
        %1036 = vmatprep.subr.mxu0 0.0
        %1037 = vmatpush1.msra.mxu0 0.0
        %1038 = vmatprep.subr.mxu0 0.0
        %1039 = vmatpush1.msra.mxu0 0.0
        %1040 = vmatprep.subr.mxu0 0.0
        %1041 = vmatpush1.msra.mxu0 0.0
        %1042 = vmatprep.subr.mxu0 0.0
        %1043 = vmatpush1.msra.mxu0 0.0
        %1044 = vmatprep.subr.mxu0 0.0
        %1045 = vmatpush1.msra.mxu0 0.0
        %1046 = vmatprep.subr.mxu0 0.0
        %1047 = vmatpush1.msra.mxu0 0.0
        %1048 = vmatprep.subr.mxu0 0.0
        %1049 = vmatpush1.msra.mxu0 0.0
        %1050 = vmatprep.subr.mxu0 0.0
        %1051 = vmatpush1.msra.mxu0 0.0
        %1052 = vmatprep.subr.mxu0 0.0
        %1053 = vmatpush1.msra.mxu0 0.0
        %1054 = vmatprep.subr.mxu0 0.0
        %1055 = vmatpush1.msra.mxu0 0.0
        %1056 = vmatprep.subr.mxu0 0.0
        %1057 = vmatpush1.msra.mxu0 0.0
        %1058 = vmatprep.subr.mxu0 0.0
        %1059 = vmatpush1.msra.mxu0 0.0
        %1060 = vmatprep.subr.mxu0 0.0
        %1061 = vmatpush1.msra.mxu0 0.0
        %1062 = vmatprep.mubr.f32.mxu0 0.0
        %1063 = vmatmul.mubr.f32.gmra.mrb[0].mxu0 %v996
        %v1064 = vpop.f32.mrb[0].mxu0
        %v1065 = vadd.f32 %v285, %v1064
        %v1066 = vpop.f32.mrb[0].mxu0
        %v1067 = vadd.f32 %v285, %v1066
        %1068 = vdwg.mxu0
        %1069 = vmatprep.subr.mxu0 0.0
        %1070 = vmatpush1.msra.mxu0 %v991
        %1071 = vmatprep.subr.mxu0 0.0
        %1072 = vmatpush1.msra.mxu0 %v994
        %1073 = vmatprep.subr.mxu0 0.0
        %1074 = vmatpush1.msra.mxu0 0.0
        %1075 = vmatprep.subr.mxu0 0.0
        %1076 = vmatpush1.msra.mxu0 0.0
        %1077 = vmatprep.subr.mxu0 0.0
        %1078 = vmatpush1.msra.mxu0 0.0
        %1079 = vmatprep.subr.mxu0 0.0
        %1080 = vmatpush1.msra.mxu0 0.0
        %1081 = vmatprep.subr.mxu0 0.0
        %1082 = vmatpush1.msra.mxu0 0.0
        %1083 = vmatprep.subr.mxu0 0.0
        %1084 = vmatpush1.msra.mxu0 0.0
        %1085 = vmatprep.subr.mxu0 0.0
        %1086 = vmatpush1.msra.mxu0 0.0
        %1087 = vmatprep.subr.mxu0 0.0
        %1088 = vmatpush1.msra.mxu0 0.0
        %1089 = vmatprep.subr.mxu0 0.0
        %1090 = vmatpush1.msra.mxu0 0.0
        %1091 = vmatprep.subr.mxu0 0.0
        %1092 = vmatpush1.msra.mxu0 0.0
        %1093 = vmatprep.subr.mxu0 0.0
        %1094 = vmatpush1.msra.mxu0 0.0
        %1095 = vmatprep.subr.mxu0 0.0
        %1096 = vmatpush1.msra.mxu0 0.0
        %1097 = vmatprep.subr.mxu0 0.0
        %1098 = vmatpush1.msra.mxu0 0.0
        %1099 = vmatprep.subr.mxu0 0.0
        %1100 = vmatpush1.msra.mxu0 0.0
        %1101 = vmatprep.subr.mxu0 0.0
        %1102 = vmatpush1.msra.mxu0 0.0
        %1103 = vmatprep.subr.mxu0 0.0
        %1104 = vmatpush1.msra.mxu0 0.0
        %1105 = vmatprep.subr.mxu0 0.0
        %1106 = vmatpush1.msra.mxu0 0.0
        %1107 = vmatprep.subr.mxu0 0.0
        %1108 = vmatpush1.msra.mxu0 0.0
        %1109 = vmatprep.subr.mxu0 0.0
        %1110 = vmatpush1.msra.mxu0 0.0
        %1111 = vmatprep.subr.mxu0 0.0
        %1112 = vmatpush1.msra.mxu0 0.0
        %1113 = vmatprep.subr.mxu0 0.0
        %1114 = vmatpush1.msra.mxu0 0.0
        %1115 = vmatprep.subr.mxu0 0.0
        %1116 = vmatpush1.msra.mxu0 0.0
        %1117 = vmatprep.subr.mxu0 0.0
        %1118 = vmatpush1.msra.mxu0 0.0
        %1119 = vmatprep.subr.mxu0 0.0
        %1120 = vmatpush1.msra.mxu0 0.0
        %1121 = vmatprep.subr.mxu0 0.0
        %1122 = vmatpush1.msra.mxu0 0.0
        %1123 = vmatprep.subr.mxu0 0.0
        %1124 = vmatpush1.msra.mxu0 0.0
        %1125 = vmatprep.subr.mxu0 0.0
        %1126 = vmatpush1.msra.mxu0 0.0
        %1127 = vmatprep.subr.mxu0 0.0
        %1128 = vmatpush1.msra.mxu0 0.0
        %1129 = vmatprep.subr.mxu0 0.0
        %1130 = vmatpush1.msra.mxu0 0.0
        %1131 = vmatprep.subr.mxu0 0.0
        %1132 = vmatpush1.msra.mxu0 0.0
        %1133 = vmatprep.mubr.f32.mxu0 0.0
        %1134 = vmatmul.mubr.f32.gmra.mrb[0].mxu0 %v996
        %v1135 = vpop.f32.mrb[0].mxu0
        %v1136 = vadd.f32 %v285, %v1135
        %v1137 = vpop.f32.mrb[0].mxu0
        %1138 = vdwg.mxu0
        %s1139 = scalar_lea.vmem %s201, 72 [#allocation8]
        %1140 = vst [vmem:[%s1139] sm:$0xff] %v1065
        %1141 = vst [vmem:[%s1139 + $0x8] sm:$0xff] %v1067
        %1142 = vst.msk [vmem:[%s1139 + $0x10] sm:$0xff] %vm434, %v1136
        %s1143 = sand.u32 %s97, 1
        %s1144 = scalar_lea.sflag [#allocation5], %s1143
        %s1145 = sand.u32 %s97, 1
        %s1146 = smul.addr %s1145, 96
        %s1147 = scalar_lea.vmem [#allocation8], %s1146
        // Predicated region
        $region41: #{tpu_custom_call.1} parent=31 // pred_check
          %p1148 = pneg %p107
        $region42: #{tpu_custom_call.1} parent=31 // pred_check_branch
          %1150 = sbr.rel (%p1148) target = $region44
        $region43: #{tpu_custom_call.1} parent=31 // pred_region
          %s1152 = ssub.s32 1536, 1536
          %1153 = vsyncadd %s1144, %s1152
          %s1154 = smul.addr %s21, 12
          %s1155 = smul.addr %s1154, 128
          %s1156 = scalar_lea.hbm %s3, %s1155
          %s1157 = sshll.u32 %s1147, 4
          %s1158 = int_to_ptr.vmem [resolvable:$true] %s1157
          %1163 = dma.vmem_to_hbm [thread:$0]  %s1158, 1536, %s1156, %s1144, 384, 384, 24
        $region44: #{tpu_custom_call.1} parent=31 // pred_fallthru
          _
      $region32: #{tpu_custom_call.1} parent=5 // pred_fallthru
        _
      %p1164 = scmp.le.s32.totalorder 2, %s16
      // Predicated region
      $region45: #{tpu_custom_call.1} parent=5 // pred_check
        %p1165 = pneg %p1164
      $region46: #{tpu_custom_call.1} parent=5 // pred_check_branch
        %1167 = sbr.rel (%p1165) target = $region48
      $region47: #{tpu_custom_call.1} parent=5 // pred_region
        %s1168 = ssub.s32 %s16, 2
        // Predicated region
        $region49: #{tpu_custom_call.1} parent=47 // pred_check
          %p1169 = pneg %p113
        $region50: #{tpu_custom_call.1} parent=47 // pred_check_branch
          %1171 = sbr.rel (%p1169) target = $region52
        $region51: #{tpu_custom_call.1} parent=47 // pred_region
          %s1172 = sand.u32 %s98, 1
          %s1173 = scalar_lea.sflag [#allocation5], %s1172
          %s1174 = sand.u32 %s98, 1
          %s1175 = smul.addr %s1174, 96
          %s1176 = scalar_lea.vmem [#allocation8], %s1175
          %1177 = dma.done %s1173, 1536
        $region52: #{tpu_custom_call.1} parent=47 // pred_fallthru
          _
      $region48: #{tpu_custom_call.1} parent=5 // pred_fallthru
        _
    $region6: #{tpu_custom_call.1} parent=1 // loop_footer
      %s20 = sadd.s32 1, %s16
    $region7: #{tpu_custom_call.1} parent=1 // loop_footer_branch
      %15 = sbr.rel target = $region3
    $region8: #{tpu_custom_call.1} parent=1 // loop_exit
      _
    %1178 = vsyncpa [#allocation4], 1
    %s1179 = scalar_lea.sflag [#allocation4], 1
    %1180 = vsyncpa %s1179, 1
    %1181 = vsyncpa [#allocation7], 1
    %1182 = vsyncpa [#allocation5], 1
    %s1183 = scalar_lea.sflag [#allocation5], 1
    %1184 = vsyncpa %s1183, 1

</llo_original>
